<compile_context>
chip_gen: v5e
topology: v5e:2x2
jax: 0.10.0
libtpu: 0.0.40
codegen_flags: <defaults>
</compile_context>

<pallas_src>
import functools

import jax
import jax.numpy as jnp
from jax import lax
from jax.experimental import pallas as pl
from jax.experimental.pallas import tpu as pltpu

LN_EPS = 1e-5                       # nn.LayerNorm default
_ACT_DTYPE = jnp.bfloat16           # inter-stage activation storage dtype
_LANE = 128
_SUB_TOKENS = 512                   # target tokens per in-kernel compute chunk
_MAX_TILE_TOKENS = 8192             # cap on tokens per DMA tile (bounds unroll count)


# ---------------------------------------------------------------------------
# small helpers
# ---------------------------------------------------------------------------
def _cdiv(a, b):
    return -(-a // b)


def _round_up(x, m):
    return (x + m - 1) // m * m


def _divisors(n):
    return [d for d in range(1, n + 1) if n % d == 0]


def _pad_axis(a, target, axis):
    pad = target - a.shape[axis]
    if pad <= 0:
        return a
    widths = [(0, 0)] * a.ndim
    widths[axis] = (0, pad)
    return jnp.pad(a, widths)


# ---------------------------------------------------------------------------
# generation-aware VMEM budgets (v5e/v6e: 128 MiB physical, v7x: 64 MiB per core)
# ---------------------------------------------------------------------------
def _vmem_budgets():
    try:
        cap = int(pltpu.get_tpu_info().vmem_capacity_bytes)
    except Exception:
        cap = 64 * 1024 * 1024                 # conservative fallback (v7x per-core)
    limit = min(int(cap * 0.78), cap - 8 * 1024 * 1024, 100 * 1024 * 1024)
    limit = max(limit, 32 * 1024 * 1024)
    budget = int(limit * 0.75)                 # tile-sizing headroom under the limit
    return limit, budget


_VMEM_LIMIT_BYTES, _VMEM_BUDGET = _vmem_budgets()


# ---------------------------------------------------------------------------
# single-buffering probe for constant-index operands (pipeline_mode=pl.Buffered(1))
# ---------------------------------------------------------------------------
_BUFFERED1_OK = None


def _buffered_one_supported():
    global _BUFFERED1_OK
    if _BUFFERED1_OK is None:
        try:
            def _k(x_ref, o_ref):
                o_ref[...] = x_ref[...] + 1.0

            f = pl.pallas_call(
                _k,
                out_shape=jax.ShapeDtypeStruct((8, 128), jnp.float32),
                grid=(2,),
                in_specs=[pl.BlockSpec((8, 128), lambda i: (0, 0),
                                       pipeline_mode=pl.Buffered(1))],
                out_specs=pl.BlockSpec((8, 128), lambda i: (0, 0)),
            )
            jax.block_until_ready(f(jnp.zeros((8, 128), jnp.float32)))
            _BUFFERED1_OK = True
        except Exception:
            _BUFFERED1_OK = False
    return _BUFFERED1_OK


def _const_spec(block_shape, index_map):
    """BlockSpec for operands whose block index never changes: single-buffer if possible."""
    if _buffered_one_supported():
        return pl.BlockSpec(block_shape, index_map, pipeline_mode=pl.Buffered(1))
    return pl.BlockSpec(block_shape, index_map)


# ---------------------------------------------------------------------------
# tile sizing
# ---------------------------------------------------------------------------
def _pick_row_tiles(ho, wo, c2, co_pad, in_bytes, out_bytes, w_bufs):
    """(tile_h, sub_h): DMA-tile rows (cdiv grid over ho) and compute-chunk rows.

    sub_h bounds the f32 working set (~_SUB_TOKENS tokens); tile_h is the largest
    multiple of sub_h whose (double-buffered) DMA blocks fit the VMEM budget."""
    sub_h = max(1, _cdiv(_SUB_TOKENS, wo))
    if sub_h >= 8:
        sub_h = _round_up(sub_h, 8)
    sub_h = min(sub_h, ho)
    sub_tok = sub_h * wo
    const_bytes = (w_bufs * 2 * c2 * co_pad * 2          # folded weight (bf16)
                   + w_bufs * co_pad * 4                 # bias row
                   + 7 * sub_tok * c2 * 4                # f32 LN working set (sub-chunk)
                   + sub_tok * co_pad * 4)               # f32 matmul acc (sub-chunk)

    def fits(th):
        tok = th * wo
        dma = (2 * (2 * tok * c2 * in_bytes)             # double-buffered input block
               + 2 * tok * co_pad * out_bytes)           # double-buffered output block
        return const_bytes + dma <= _VMEM_BUDGET and tok <= _MAX_TILE_TOKENS

    tile_h = sub_h
    m = 2
    while sub_h * m <= ho and fits(sub_h * m):
        tile_h = sub_h * m
        m += 1
    return tile_h, sub_h


def _pick_batch_tile(b, cap=64):
    """Output block is (tile_b, nc_pad): tile_b must be a multiple of 8 or the full B."""
    valid = [d for d in _divisors(b) if d == b or d % 8 == 0]
    small = [d for d in valid if d <= cap]
    return max(small) if small else min(valid)


def _pick_hw_tile(hw, tile_b, cp, nc_pad, w_bufs, max_tokens=4096):
    """Largest divisor of HW (multiple of 8, or full HW) fitting the VMEM budget."""
    valid = [d for d in _divisors(hw) if d == hw or d % 8 == 0]
    const = (w_bufs * cp * nc_pad * 2        # folded head weight (bf16)
             + w_bufs * nc_pad * 4           # folded bias
             + tile_b * cp * 4               # accumulator scratch
             + 2 * tile_b * nc_pad * 4)      # double-buffered output block
    best = valid[0]
    for d in valid:
        vmem = const + 2 * tile_b * d * cp * 2 + 4 * tile_b * d * cp * 4
        if d <= max_tokens and vmem <= _VMEM_BUDGET:
            best = max(best, d)
    return best


# ---------------------------------------------------------------------------
# Kernel 1: fused 2x2 patch-merge gather + LayerNorm(4*dim) + gamma-folded Linear
# ---------------------------------------------------------------------------
def _merge_ln_linear_kernel(x_ref, w_ref, b_ref, o_ref, *,
                            c_real, c_pad, inv_n, sub_h):
    """x_ref: (tile_h, 2, Wo, 2*c_pad)   dim 1 = H-parity (even/odd source row);
              the last dim packs the W-parity pair: [wp=0 chunk | wp=1 chunk].
       w_ref: (2, 2*c_pad, co_pad) bf16  gamma-folded reduction weight, same chunk order.
       b_ref: (1, co_pad) f32            beta @ W.T (constant output-row bias).
       o_ref: (tile_h, Wo, co_pad)."""
    tile_h, _, wo, c2 = x_ref.shape
    n_sub = tile_h // sub_h
    sub_tok = sub_h * wo

    def chunk(s, carry):
        r0 = s * sub_h
        if sub_h % 8 == 0:
            r0 = pl.multiple_of(r0, 8)
        # Even / odd source rows -> the two feature-chunk halves of each merged token.
        # TODO(synk): when wo % 8 != 0 (tiny late-stage images) this flatten costs a
        # sublane relayout; acceptable because those stages carry the least work.
        xe = x_ref[pl.ds(r0, sub_h), 0, :, :].reshape(sub_tok, c2).astype(jnp.float32)
        xo = x_ref[pl.ds(r0, sub_h), 1, :, :].reshape(sub_tok, c2).astype(jnp.float32)

        # LayerNorm statistics over the 4*c_real real features (padded lanes hold zeros).
        mu = (jnp.sum(xe, axis=-1, keepdims=True)
              + jnp.sum(xo, axis=-1, keepdims=True)) * inv_n
        xce = xe - mu
        xco = xo - mu
        if c_pad != c_real:                   # keep padded lanes out of the variance
            lane = lax.broadcasted_iota(jnp.int32, (1, c2), 1)
            mask = (lane % c_pad) < c_real
            xce = jnp.where(mask, xce, 0.0)
            xco = jnp.where(mask, xco, 0.0)
        var = (jnp.sum(xce * xce, axis=-1, keepdims=True)
               + jnp.sum(xco * xco, axis=-1, keepdims=True)) * inv_n
        r = lax.rsqrt(var + LN_EPS)
        ye = (xce * r).astype(jnp.bfloat16)   # gamma folded into w, beta into b
        yo = (xco * r).astype(jnp.bfloat16)

        # Split-K reduction Linear on the MXU, f32 accumulation, folded bias at the end.
        acc = jnp.dot(ye, w_ref[0], preferred_element_type=jnp.float32)
        acc = acc + jnp.dot(yo, w_ref[1], preferred_element_type=jnp.float32)
        acc = acc + b_ref[...]
        o_ref[pl.ds(r0, sub_h), :, :] = acc.reshape(sub_h, wo, -1).astype(o_ref.dtype)
        return carry

    lax.fori_loop(0, n_sub, chunk, 0, unroll=True)


def patch_merge_stage(x, st, w_bufs):
    """One PatchMerging2D stage: (B, H, W, c_pad) -> (B, ceil(H/2), ceil(W/2), co_pad)."""
    B, H, W, cp = x.shape
    assert cp == st["c_pad"], (cp, st["c_pad"])
    ph, pw = H % 2, W % 2
    if ph or pw:                    # matches the reference F.pad to even H/W
        x = jnp.pad(x, ((0, 0), (0, ph), (0, pw), (0, 0)))
        H, W = H + ph, W + pw
    ho, wo = H // 2, W // 2
    c2 = 2 * cp
    co_pad = st["co_pad"]

    # Free row-major reshape: (B, H, W, cp) -> (B, ho, 2, wo, 2*cp).  The 2x2 gather
    # finishes inside the kernel; the merged (..., 4*cp) tensor never hits HBM.
    xr = x.reshape(B, ho, 2, wo, c2)

    tile_h, sub_h = _pick_row_tiles(ho, wo, c2, co_pad,
                                    x.dtype.itemsize, jnp.dtype(_ACT_DTYPE).itemsize,
                                    w_bufs)
    kern = functools.partial(_merge_ln_linear_kernel, c_real=st["c_real"], c_pad=cp,
                             inv_n=1.0 / (4.0 * st["c_real"]), sub_h=sub_h)
    return pl.pallas_call(
        kern,
        out_shape=jax.ShapeDtypeStruct((B, ho, wo, co_pad), _ACT_DTYPE),
        grid_spec=pltpu.PrefetchScalarGridSpec(
            num_scalar_prefetch=0,
            grid=(B, _cdiv(ho, tile_h)),      # cdiv grid: no degenerate tiles on odd ho
            in_specs=[
                pl.BlockSpec((None, tile_h, 2, wo, c2), lambda b, i: (b, i, 0, 0, 0)),
                _const_spec((2, c2, co_pad), lambda b, i: (0, 0, 0)),
                _const_spec((1, co_pad), lambda b, i: (0, 0)),
            ],
            out_specs=pl.BlockSpec((None, tile_h, wo, co_pad), lambda b, i: (b, i, 0, 0)),
        ),
        compiler_params=pltpu.CompilerParams(
            dimension_semantics=("parallel", "parallel"),
            vmem_limit_bytes=_VMEM_LIMIT_BYTES,
        ),
    )(xr, st["w"], st["bias"])


# ---------------------------------------------------------------------------
# Kernel 2: classifier head as a gridded reduction:
#   per-token LayerNorm (affine folded into the head) -> spatial sum into a
#   (tile_b, C) VMEM accumulator -> (mean + bf16 head matmul + folded bias) at the
#   last HW step.
# ---------------------------------------------------------------------------
def _classifier_kernel(x_ref, wh_ref, bh_ref, o_ref, acc_ref, *,
                       c_real, c_pad, inv_c, inv_hw):
    t = pl.program_id(1)

    @pl.when(t == 0)
    def _():
        acc_ref[...] = jnp.zeros_like(acc_ref)

    x = x_ref[...].astype(jnp.float32)                    # (tile_b, tile_hw, c_pad)
    mu = jnp.sum(x, axis=-1, keepdims=True) * inv_c
    xc = x - mu
    if c_pad != c_real:
        lane = lax.broadcasted_iota(jnp.int32, (1, 1, c_pad), 2)
        xc = jnp.where(lane < c_real, xc, 0.0)
    var = jnp.sum(xc * xc, axis=-1, keepdims=True) * inv_c
    y = xc * lax.rsqrt(var + LN_EPS)                      # gamma/beta folded into wh/bh
    acc_ref[...] += jnp.sum(y, axis=1)                    # (tile_b, c_pad)

    @pl.when(t == pl.num_programs(1) - 1)
    def _():
        pooled = (acc_ref[...] * inv_hw).astype(jnp.bfloat16)
        o_ref[...] = (jnp.dot(pooled, wh_ref[...], preferred_element_type=jnp.float32)
                      + bh_ref[...]).astype(o_ref.dtype)


def classifier_head(tokens, cls, w_bufs):
    B, HW, cp = tokens.shape
    nc_pad = cls["nc_pad"]
    tile_b = _pick_batch_tile(B)
    tile_hw = _pick_hw_tile(HW, tile_b, cp, nc_pad, w_bufs)
    kern = functools.partial(_classifier_kernel, c_real=cls["c_real"], c_pad=cp,
                             inv_c=1.0 / cls["c_real"], inv_hw=1.0 / HW)
    out = pl.pallas_call(
        kern,
        out_shape=jax.ShapeDtypeStruct((B, nc_pad), jnp.float32),
        grid_spec=pltpu.PrefetchScalarGridSpec(
            num_scalar_prefetch=0,
            grid=(B // tile_b, HW // tile_hw),
            in_specs=[
                pl.BlockSpec((tile_b, tile_hw, cp), lambda b, t: (b, t, 0)),
                _const_spec((cp, nc_pad), lambda b, t: (0, 0)),
                _const_spec((1, nc_pad), lambda b, t: (0, 0)),
            ],
            out_specs=pl.BlockSpec((tile_b, nc_pad), lambda b, t: (b, 0)),
            scratch_shapes=[pltpu.VMEM((tile_b, cp), jnp.float32)],
        ),
        compiler_params=pltpu.CompilerParams(
            dimension_semantics=("parallel", "arbitrary"),
            vmem_limit_bytes=_VMEM_LIMIT_BYTES,
        ),
    )(tokens, cls["wh"], cls["bh"])
    return out[:, :cls["nc"]]


# ---------------------------------------------------------------------------
# Forward
# ---------------------------------------------------------------------------
def super_mamba_forward(kparams, x_nchw):
    # TODO(synk): ConvNet (self.preembd) and VSSBlock are not defined in the reference
    # source; both are treated as identity.
    # TODO(synk): fold this NCHW->NHWC permute + bf16 cast + stage-0 channel pad into
    # preembd's output layout once ConvNet exists (it is one extra HBM pass today).
    w_bufs = 1 if _buffered_one_supported() else 2
    x = jnp.transpose(x_nchw, (0, 2, 3, 1)).astype(_ACT_DTYPE)
    c0_pad = kparams["stages"][0]["c_pad"]
    if x.shape[-1] != c0_pad:
        x = _pad_axis(x, c0_pad, 3)
    for st in kparams["stages"]:
        x = patch_merge_stage(x, st, w_bufs)
    B, H, W, cp = x.shape
    tokens = x.reshape(B, H * W, cp)
    return classifier_head(tokens, kparams["cls"], w_bufs)


# ---------------------------------------------------------------------------
# Parameters: torch-layout init (mirrors Super_Mamba._init_weights), then a repack
# into the padded / chunk-permuted / affine-folded / bf16 kernel layout.
# ---------------------------------------------------------------------------
def _trunc_normal(key, shape, std=0.02):
    return jax.random.truncated_normal(key, -2.0, 2.0, shape, jnp.float32) * std


def init_params(key, dims, num_classes):
    # NOTE: the torch module initializes LayerNorm to gamma=1 / beta=0; non-trivial
    # values are drawn here so the offline gamma/beta -> weight fold is actually
    # exercised by the numerics check (semantics hold for any LN parameters).
    depth = len(dims) - 1
    stages = []
    for i in range(depth):
        cin4, cout = 4 * dims[i], dims[i + 1]
        key, kw, kg, kb = jax.random.split(key, 4)
        stages.append(dict(
            gamma=1.0 + 0.1 * jax.random.normal(kg, (cin4,), jnp.float32),
            beta=0.1 * jax.random.normal(kb, (cin4,), jnp.float32),
            w=_trunc_normal(kw, (cout, cin4)),           # torch Linear layout (out, in)
        ))
    key, kh, kg, kb = jax.random.split(key, 4)
    cls = dict(
        gamma=1.0 + 0.1 * jax.random.normal(kg, (dims[-1],), jnp.float32),
        beta=0.1 * jax.random.normal(kb, (dims[-1],), jnp.float32),
        wh=_trunc_normal(kh, (num_classes, dims[-1])),   # torch (out, in)
        bh=0.02 * jax.random.normal(key, (num_classes,), jnp.float32),
    )
    return {"stages": stages, "cls": cls}


def prepare_params(params, dims, num_classes):
    """Repack torch-layout params into the padded, chunk-permuted, affine-folded kernel
    layout.  Chunk halves: even source rows carry [x0|x2], odd rows carry [x1|x3]."""
    perm = jnp.array([0, 2, 1, 3])
    stages_k = []
    c0 = dims[0]
    c0_pad = _round_up(c0, _LANE)
    # Lane-pad stage-0 channels only when the pad overhead is small (real-sized dims);
    # for tiny dims a 128-pad would multiply stage-0 HBM traffic instead of helping.
    c_pad = c0_pad if c0_pad <= 2 * c0 else c0
    for i, st in enumerate(params["stages"]):
        c_real, co_real = dims[i], dims[i + 1]
        co_pad = _round_up(co_real, _LANE)
        w_t = st["w"].T                                   # (4C, out)
        w_fold = w_t * st["gamma"][:, None]               # fold LN gamma into the weight
        bias = st["beta"] @ w_t                           # fold LN beta into a bias row
        w4 = w_fold.reshape(4, c_real, co_real)
        w4 = _pad_axis(_pad_axis(w4, c_pad, 1), co_pad, 2)
        stages_k.append(dict(
            w=jnp.take(w4, perm, axis=0).reshape(2, 2 * c_pad, co_pad).astype(jnp.bfloat16),
            bias=_pad_axis(bias.reshape(1, co_real), co_pad, 1).astype(jnp.float32),
            c_real=c_real, c_pad=c_pad, co_real=co_real, co_pad=co_pad,
        ))
        c_pad = co_pad
    c_real = dims[-1]
    nc_pad = _round_up(num_classes, _LANE)
    cls = params["cls"]
    wh_t = cls["wh"].T                                    # (C, num_classes)
    wh_fold = wh_t * cls["gamma"][:, None]
    bh_fold = cls["beta"] @ wh_t + cls["bh"]
    cls_k = dict(
        wh=_pad_axis(_pad_axis(wh_fold, c_pad, 0), nc_pad, 1).astype(jnp.bfloat16),
        bh=_pad_axis(bh_fold.reshape(1, num_classes), nc_pad, 1).astype(jnp.float32),
        c_real=c_real, c_pad=c_pad, nc=num_classes, nc_pad=nc_pad,
    )
    return dict(stages=stages_k, cls=cls_k)


# ---------------------------------------------------------------------------
# Pure-JAX f32 reference (matches the torch module with preembd/VSSBlock = identity)
# ---------------------------------------------------------------------------
def reference_forward(params, x_nchw):
    x = jnp.transpose(x_nchw, (0, 2, 3, 1)).astype(jnp.float32)
    for st in params["stages"]:
        _, H, W, _ = x.shape
        if H % 2 or W % 2:
            x = jnp.pad(x, ((0, 0), (0, H % 2), (0, W % 2), (0, 0)))
        x0 = x[:, 0::2, 0::2, :]
        x1 = x[:, 1::2, 0::2, :]
        x2 = x[:, 0::2, 1::2, :]
        x3 = x[:, 1::2, 1::2, :]
        xm = jnp.concatenate([x0, x1, x2, x3], axis=-1)
        mu = jnp.mean(xm, axis=-1, keepdims=True)
        var = jnp.mean((xm - mu) ** 2, axis=-1, keepdims=True)
        y = (xm - mu) / jnp.sqrt(var + LN_EPS) * st["gamma"] + st["beta"]
        x = y @ st["w"].T
    cls = params["cls"]
    mu = jnp.mean(x, axis=-1, keepdims=True)
    var = jnp.mean((x - mu) ** 2, axis=-1, keepdims=True)
    y = (x - mu) / jnp.sqrt(var + LN_EPS) * cls["gamma"] + cls["beta"]
    pooled = jnp.mean(y, axis=(1, 2))
    return pooled @ cls["wh"].T + cls["bh"]


if __name__ == "__main__":
    key = jax.random.PRNGKey(0)

    # Small config consistent with the module: dims=4, depth=2 -> dims=[4, 8, 16]
    depth = 2
    base_dim = 4
    dims = [base_dim * 2 ** i for i in range(depth + 1)]
    num_classes = 10
    B, H, W = 2, 16, 16

    k_x, k_p = jax.random.split(key)
    x = jax.random.normal(k_x, (B, dims[0], H, W), jnp.float32)   # NCHW module input
    params = init_params(k_p, dims, num_classes)
    kparams = prepare_params(params, dims, num_classes)

    _buffered_one_supported()       # resolve the Buffered(1) probe eagerly

    fwd = jax.jit(functools.partial(super_mamba_forward, kparams))
    logits = fwd(x)
    jax.block_until_ready(logits)

    assert logits.shape == (B, num_classes), logits.shape
    assert bool(jnp.all(jnp.isfinite(logits)))

    # Numerical check vs. the f32 pure-JAX reference (bf16 MXU/activation tolerance).
    ref = jax.jit(functools.partial(reference_forward, params))(x)
    jax.block_until_ready(ref)
    assert jnp.allclose(logits, ref, rtol=1.5e-1, atol=1.5e-2), \
        float(jnp.max(jnp.abs(logits - ref)))

    print("KERNEL_OK")
</pallas_src>

<mosaic_0001>
module attributes {stable_mosaic.version = 11 : i64} {
  func.func @_k(%arg0: i32, %arg1: memref<8x128xf32, #tpu.memory_space<vmem>>, %arg2: memref<8x128xf32, #tpu.memory_space<vmem>>) attributes {dimension_semantics = [#tpu.dimension_semantics<arbitrary>], iteration_bounds = array<i64: 2>, scalar_prefetch = 0 : i64, scratch_operands = 0 : i64, tpu.core_type = #tpu.core_type<tc>, window_params = [{pipeline_mode = #tpu.pipeline_mode<synchronous>, transform_indices = @transform_0, window_bounds = array<i64: 8, 128>}, {pipeline_mode = #tpu.pipeline_mode<synchronous>, transform_indices = @transform_1, window_bounds = array<i64: 8, 128>}]} {
    %c0 = arith.constant 0 : index
    %c0_0 = arith.constant 0 : index
    %0 = vector.load %arg1[%c0, %c0_0] : memref<8x128xf32, #tpu.memory_space<vmem>>, vector<8x128xf32>
    %cst = arith.constant 1.000000e+00 : f32
    %1 = vector.broadcast %cst : f32 to vector<8x128xf32>
    %2 = arith.addf %0, %1 : vector<8x128xf32>
    %c0_1 = arith.constant 0 : index
    %c0_2 = arith.constant 0 : index
    %3 = vector.load %arg2[%c0_1, %c0_2] : memref<8x128xf32, #tpu.memory_space<vmem>>, vector<8x128xf32>
    tpu.vector_store %arg2[%c0_1, %c0_2], %2 {strides = array<i32>} : memref<8x128xf32, #tpu.memory_space<vmem>>, vector<8x128xf32>,
    return
  }
  func.func @transform_0(%arg0: i32) -> (i32, i32) {
    %c0_i32 = arith.constant 0 : i32
    %c0_i32_0 = arith.constant 0 : i32
    %c0_i32_1 = arith.constant 0 : i32
    return %c0_i32, %c0_i32_0 : i32, i32
  }
  func.func @transform_1(%arg0: i32) -> (i32, i32) {
    %c0_i32 = arith.constant 0 : i32
    %c0_i32_0 = arith.constant 0 : i32
    %c0_i32_1 = arith.constant 0 : i32
    return %c0_i32, %c0_i32_0 : i32, i32
  }
}

module attributes {stable_mosaic.version = 11 : i64} {
  func.func @_merge_ln_linear_kernel(%arg0: i32, %arg1: i32, %arg2: memref<1x8x2x8x8xbf16, #tpu.memory_space<vmem>>, %arg3: memref<2x8x128xbf16, #tpu.memory_space<vmem>>, %arg4: memref<1x128xf32, #tpu.memory_space<vmem>>, %arg5: memref<1x8x8x128xbf16, #tpu.memory_space<vmem>>) attributes {dimension_semantics = [#tpu.dimension_semantics<parallel>, #tpu.dimension_semantics<parallel>], iteration_bounds = array<i64: 2, 1>, scalar_prefetch = 0 : i64, scratch_operands = 0 : i64, tpu.core_type = #tpu.core_type<tc>, window_params = [{transform_indices = @transform_0, window_bounds = array<i64: 1, 8, 2, 8, 8>}, {pipeline_mode = #tpu.pipeline_mode<synchronous>, transform_indices = @transform_1, window_bounds = array<i64: 2, 8, 128>}, {pipeline_mode = #tpu.pipeline_mode<synchronous>, transform_indices = @transform_2, window_bounds = array<i64: 1, 128>}, {transform_indices = @transform_3, window_bounds = array<i64: 1, 8, 8, 128>}]} {
    %c0_i32 = arith.constant 0 : i32
    %c8_i32 = arith.constant 8 : i32
    %0 = arith.muli %c0_i32, %c8_i32 : i32
    %1 = tpu.assume_multiple %0, 8 : i32
    %c0 = arith.constant 0 : index
    %2 = arith.index_cast %1 : i32 to index
    %c0_0 = arith.constant 0 : index
    %c0_1 = arith.constant 0 : index
    %c0_2 = arith.constant 0 : index
    %3 = vector.load %arg2[%c0, %2, %c0_0, %c0_1, %c0_2] : memref<1x8x2x8x8xbf16, #tpu.memory_space<vmem>>, vector<1x8x1x8x8xbf16>
    %4 = vector.shape_cast %3 : vector<1x8x1x8x8xbf16> to vector<8x8x8xbf16>
    %5 = vector.shape_cast %4 : vector<8x8x8xbf16> to vector<64x8xbf16>
    %6 = arith.extf %5 : vector<64x8xbf16> to vector<64x8xf32>
    %c0_3 = arith.constant 0 : index
    %7 = arith.index_cast %1 : i32 to index
    %c1 = arith.constant 1 : index
    %c0_4 = arith.constant 0 : index
    %c0_5 = arith.constant 0 : index
    %8 = vector.load %arg2[%c0_3, %7, %c1, %c0_4, %c0_5] : memref<1x8x2x8x8xbf16, #tpu.memory_space<vmem>>, vector<1x8x1x8x8xbf16>
    %9 = vector.shape_cast %8 : vector<1x8x1x8x8xbf16> to vector<8x8x8xbf16>
    %10 = vector.shape_cast %9 : vector<8x8x8xbf16> to vector<64x8xbf16>
    %11 = arith.extf %10 : vector<64x8xbf16> to vector<64x8xf32>
    %cst = arith.constant dense<0.000000e+00> : vector<64xf32>
    %12 = vector.multi_reduction <add>, %6, %cst [1] : vector<64x8xf32> to vector<64xf32>
    %13 = vector.shape_cast %12 : vector<64xf32> to vector<64x1xf32>
    %cst_6 = arith.constant dense<0.000000e+00> : vector<64xf32>
    %14 = vector.multi_reduction <add>, %11, %cst_6 [1] : vector<64x8xf32> to vector<64xf32>
    %15 = vector.shape_cast %14 : vector<64xf32> to vector<64x1xf32>
    %16 = arith.addf %13, %15 : vector<64x1xf32>
    %cst_7 = arith.constant 6.250000e-02 : f32
    %17 = vector.broadcast %cst_7 : f32 to vector<64x1xf32>
    %18 = arith.mulf %16, %17 : vector<64x1xf32>
    %19 = vector.broadcast %18 : vector<64x1xf32> to vector<64x8xf32>
    %20 = arith.subf %6, %19 : vector<64x8xf32>
    %21 = vector.broadcast %18 : vector<64x1xf32> to vector<64x8xf32>
    %22 = arith.subf %11, %21 : vector<64x8xf32>
    %23 = arith.mulf %20, %20 : vector<64x8xf32>
    %cst_8 = arith.constant dense<0.000000e+00> : vector<64xf32>
    %24 = vector.multi_reduction <add>, %23, %cst_8 [1] : vector<64x8xf32> to vector<64xf32>
    %25 = vector.shape_cast %24 : vector<64xf32> to vector<64x1xf32>
    %26 = arith.mulf %22, %22 : vector<64x8xf32>
    %cst_9 = arith.constant dense<0.000000e+00> : vector<64xf32>
    %27 = vector.multi_reduction <add>, %26, %cst_9 [1] : vector<64x8xf32> to vector<64xf32>
    %28 = vector.shape_cast %27 : vector<64xf32> to vector<64x1xf32>
    %29 = arith.addf %25, %28 : vector<64x1xf32>
    %cst_10 = arith.constant 6.250000e-02 : f32
    %30 = vector.broadcast %cst_10 : f32 to vector<64x1xf32>
    %31 = arith.mulf %29, %30 : vector<64x1xf32>
    %cst_11 = arith.constant 9.99999974E-6 : f32
    %32 = vector.broadcast %cst_11 : f32 to vector<64x1xf32>
    %33 = arith.addf %31, %32 : vector<64x1xf32>
    %34 = math.rsqrt %33 : vector<64x1xf32>
    %35 = vector.broadcast %34 : vector<64x1xf32> to vector<64x8xf32>
    %36 = arith.mulf %20, %35 : vector<64x8xf32>
    %37 = arith.truncf %36 : vector<64x8xf32> to vector<64x8xbf16>
    %38 = vector.broadcast %34 : vector<64x1xf32> to vector<64x8xf32>
    %39 = arith.mulf %22, %38 : vector<64x8xf32>
    %40 = arith.truncf %39 : vector<64x8xf32> to vector<64x8xbf16>
    %c0_12 = arith.constant 0 : index
    %c0_13 = arith.constant 0 : index
    %c0_14 = arith.constant 0 : index
    %41 = vector.load %arg3[%c0_12, %c0_13, %c0_14] : memref<2x8x128xbf16, #tpu.memory_space<vmem>>, vector<1x8x128xbf16>
    %42 = vector.shape_cast %41 : vector<1x8x128xbf16> to vector<8x128xbf16>
    %cst_15 = arith.constant dense<0.000000e+00> : vector<64x128xf32>
    %43 = tpu.matmul %37, %42, %cst_15 {dimension_numbers = #tpu.dot_dimension_numbers<[1], [0], [0], [1], [0, 0, 1, 1], [], []>} : vector<64x8xbf16>, vector<8x128xbf16>, vector<64x128xf32> -> vector<64x128xf32>
    %c1_16 = arith.constant 1 : index
    %c0_17 = arith.constant 0 : index
    %c0_18 = arith.constant 0 : index
    %44 = vector.load %arg3[%c1_16, %c0_17, %c0_18] : memref<2x8x128xbf16, #tpu.memory_space<vmem>>, vector<1x8x128xbf16>
    %45 = vector.shape_cast %44 : vector<1x8x128xbf16> to vector<8x128xbf16>
    %cst_19 = arith.constant dense<0.000000e+00> : vector<64x128xf32>
    %46 = tpu.matmul %40, %45, %cst_19 {dimension_numbers = #tpu.dot_dimension_numbers<[1], [0], [0], [1], [0, 0, 1, 1], [], []>} : vector<64x8xbf16>, vector<8x128xbf16>, vector<64x128xf32> -> vector<64x128xf32>
    %47 = arith.addf %43, %46 : vector<64x128xf32>
    %c0_20 = arith.constant 0 : index
    %c0_21 = arith.constant 0 : index
    %48 = vector.load %arg4[%c0_20, %c0_21] : memref<1x128xf32, #tpu.memory_space<vmem>>, vector<1x128xf32>
    %49 = vector.broadcast %48 : vector<1x128xf32> to vector<64x128xf32>
    %50 = arith.addf %47, %49 : vector<64x128xf32>
    %51 = vector.shape_cast %50 : vector<64x128xf32> to vector<8x8x128xf32>
    %52 = arith.truncf %51 : vector<8x8x128xf32> to vector<8x8x128xbf16>
    %c0_22 = arith.constant 0 : index
    %53 = arith.index_cast %1 : i32 to index
    %c0_23 = arith.constant 0 : index
    %c0_24 = arith.constant 0 : index
    %54 = vector.load %arg5[%c0_22, %53, %c0_23, %c0_24] : memref<1x8x8x128xbf16, #tpu.memory_space<vmem>>, vector<1x8x8x128xbf16>
    %55 = vector.shape_cast %54 : vector<1x8x8x128xbf16> to vector<8x8x128xbf16>
    %56 = vector.shape_cast %52 : vector<8x8x128xbf16> to vector<1x8x8x128xbf16>
    tpu.vector_store %arg5[%c0_22, %53, %c0_23, %c0_24], %56 {strides = array<i32>} : memref<1x8x8x128xbf16, #tpu.memory_space<vmem>>, vector<1x8x8x128xbf16>,
    %c1_i32 = arith.constant 1 : i32
    return
  }
  func.func @transform_0(%arg0: i32, %arg1: i32) -> (i32, i32, i32, i32, i32) {
    %c0_i32 = arith.constant 0 : i32
    %c0_i32_0 = arith.constant 0 : i32
    %c0_i32_1 = arith.constant 0 : i32
    %c0_i32_2 = arith.constant 0 : i32
    return %arg0, %arg1, %c0_i32, %c0_i32_0, %c0_i32_1 : i32, i32, i32, i32, i32
  }
  func.func @transform_1(%arg0: i32, %arg1: i32) -> (i32, i32, i32) {
    %c0_i32 = arith.constant 0 : i32
    %c0_i32_0 = arith.constant 0 : i32
    %c0_i32_1 = arith.constant 0 : i32
    %c0_i32_2 = arith.constant 0 : i32
    return %c0_i32, %c0_i32_0, %c0_i32_1 : i32, i32, i32
  }
  func.func @transform_2(%arg0: i32, %arg1: i32) -> (i32, i32) {
    %c0_i32 = arith.constant 0 : i32
    %c0_i32_0 = arith.constant 0 : i32
    %c0_i32_1 = arith.constant 0 : i32
    return %c0_i32, %c0_i32_0 : i32, i32
  }
  func.func @transform_3(%arg0: i32, %arg1: i32) -> (i32, i32, i32, i32) {
    %c0_i32 = arith.constant 0 : i32
    %c0_i32_0 = arith.constant 0 : i32
    %c0_i32_1 = arith.constant 0 : i32
    return %arg0, %arg1, %c0_i32, %c0_i32_0 : i32, i32, i32, i32
  }
}

module attributes {stable_mosaic.version = 11 : i64} {
  func.func @_merge_ln_linear_kernel(%arg0: i32, %arg1: i32, %arg2: memref<1x4x2x4x256xbf16, #tpu.memory_space<vmem>>, %arg3: memref<2x256x128xbf16, #tpu.memory_space<vmem>>, %arg4: memref<1x128xf32, #tpu.memory_space<vmem>>, %arg5: memref<1x4x4x128xbf16, #tpu.memory_space<vmem>>) attributes {dimension_semantics = [#tpu.dimension_semantics<parallel>, #tpu.dimension_semantics<parallel>], iteration_bounds = array<i64: 2, 1>, scalar_prefetch = 0 : i64, scratch_operands = 0 : i64, tpu.core_type = #tpu.core_type<tc>, window_params = [{transform_indices = @transform_0, window_bounds = array<i64: 1, 4, 2, 4, 256>}, {pipeline_mode = #tpu.pipeline_mode<synchronous>, transform_indices = @transform_1, window_bounds = array<i64: 2, 256, 128>}, {pipeline_mode = #tpu.pipeline_mode<synchronous>, transform_indices = @transform_2, window_bounds = array<i64: 1, 128>}, {transform_indices = @transform_3, window_bounds = array<i64: 1, 4, 4, 128>}]} {
    %c0_i32 = arith.constant 0 : i32
    %c4_i32 = arith.constant 4 : i32
    %0 = arith.muli %c0_i32, %c4_i32 : i32
    %c0 = arith.constant 0 : index
    %1 = arith.index_cast %0 : i32 to index
    %c0_0 = arith.constant 0 : index
    %c0_1 = arith.constant 0 : index
    %c0_2 = arith.constant 0 : index
    %2 = vector.load %arg2[%c0, %1, %c0_0, %c0_1, %c0_2] : memref<1x4x2x4x256xbf16, #tpu.memory_space<vmem>>, vector<1x4x1x4x256xbf16>
    %3 = vector.shape_cast %2 : vector<1x4x1x4x256xbf16> to vector<4x4x256xbf16>
    %4 = vector.shape_cast %3 : vector<4x4x256xbf16> to vector<16x256xbf16>
    %5 = arith.extf %4 : vector<16x256xbf16> to vector<16x256xf32>
    %c0_3 = arith.constant 0 : index
    %6 = arith.index_cast %0 : i32 to index
    %c1 = arith.constant 1 : index
    %c0_4 = arith.constant 0 : index
    %c0_5 = arith.constant 0 : index
    %7 = vector.load %arg2[%c0_3, %6, %c1, %c0_4, %c0_5] : memref<1x4x2x4x256xbf16, #tpu.memory_space<vmem>>, vector<1x4x1x4x256xbf16>
    %8 = vector.shape_cast %7 : vector<1x4x1x4x256xbf16> to vector<4x4x256xbf16>
    %9 = vector.shape_cast %8 : vector<4x4x256xbf16> to vector<16x256xbf16>
    %10 = arith.extf %9 : vector<16x256xbf16> to vector<16x256xf32>
    %cst = arith.constant dense<0.000000e+00> : vector<16xf32>
    %11 = vector.multi_reduction <add>, %5, %cst [1] : vector<16x256xf32> to vector<16xf32>
    %12 = vector.shape_cast %11 : vector<16xf32> to vector<16x1xf32>
    %cst_6 = arith.constant dense<0.000000e+00> : vector<16xf32>
    %13 = vector.multi_reduction <add>, %10, %cst_6 [1] : vector<16x256xf32> to vector<16xf32>
    %14 = vector.shape_cast %13 : vector<16xf32> to vector<16x1xf32>
    %15 = arith.addf %12, %14 : vector<16x1xf32>
    %cst_7 = arith.constant 3.125000e-02 : f32
    %16 = vector.broadcast %cst_7 : f32 to vector<16x1xf32>
    %17 = arith.mulf %15, %16 : vector<16x1xf32>
    %18 = vector.broadcast %17 : vector<16x1xf32> to vector<16x256xf32>
    %19 = arith.subf %5, %18 : vector<16x256xf32>
    %20 = vector.broadcast %17 : vector<16x1xf32> to vector<16x256xf32>
    %21 = arith.subf %10, %20 : vector<16x256xf32>
    %22 = tpu.iota {dimensions = array<i32: 1>} : vector<1x256xi32>
    %c128_i32 = arith.constant 128 : i32
    %c0_i32_8 = arith.constant 0 : i32
    %23 = arith.cmpi eq, %c128_i32, %c0_i32_8 : i32
    %c1_i32 = arith.constant 1 : i32
    %24 = arith.select %23, %c1_i32, %c128_i32 : i32
    %25 = vector.broadcast %24 : i32 to vector<1x256xi32>
    %26 = arith.remsi %22, %25 : vector<1x256xi32>
    %c0_i32_9 = arith.constant 0 : i32
    %27 = vector.broadcast %c0_i32_9 : i32 to vector<1x256xi32>
    %28 = arith.cmpi ne, %26, %27 : vector<1x256xi32>
    %c0_i32_10 = arith.constant 0 : i32
    %29 = vector.broadcast %c0_i32_10 : i32 to vector<1x256xi32>
    %30 = arith.cmpi slt, %26, %29 : vector<1x256xi32>
    %c0_i32_11 = arith.constant 0 : i32
    %31 = arith.cmpi slt, %24, %c0_i32_11 : i32
    %32 = vector.broadcast %31 : i1 to vector<1x256xi1>
    %33 = vector.broadcast %32 : vector<1x256xi1> to vector<1x256xi1>
    %34 = arith.xori %30, %33 : vector<1x256xi1>
    %35 = arith.andi %34, %28 : vector<1x256xi1>
    %36 = vector.broadcast %24 : i32 to vector<1x256xi32>
    %37 = arith.addi %26, %36 : vector<1x256xi32>
    %38 = arith.select %35, %37, %26 : vector<1x256xi1>, vector<1x256xi32>
    %c8_i32 = arith.constant 8 : i32
    %39 = vector.broadcast %c8_i32 : i32 to vector<1x256xi32>
    %40 = arith.cmpi slt, %38, %39 : vector<1x256xi32>
    %cst_12 = arith.constant 0.000000e+00 : f32
    %41 = vector.shape_cast %40 : vector<1x256xi1> to vector<1x256xi1>
    %42 = vector.broadcast %41 : vector<1x256xi1> to vector<16x256xi1>
    %43 = vector.broadcast %cst_12 : f32 to vector<16x256xf32>
    %44 = arith.select %42, %19, %43 : vector<16x256xi1>, vector<16x256xf32>
    %cst_13 = arith.constant 0.000000e+00 : f32
    %45 = vector.shape_cast %40 : vector<1x256xi1> to vector<1x256xi1>
    %46 = vector.broadcast %45 : vector<1x256xi1> to vector<16x256xi1>
    %47 = vector.broadcast %cst_13 : f32 to vector<16x256xf32>
    %48 = arith.select %46, %21, %47 : vector<16x256xi1>, vector<16x256xf32>
    %49 = arith.mulf %44, %44 : vector<16x256xf32>
    %cst_14 = arith.constant dense<0.000000e+00> : vector<16xf32>
    %50 = vector.multi_reduction <add>, %49, %cst_14 [1] : vector<16x256xf32> to vector<16xf32>
    %51 = vector.shape_cast %50 : vector<16xf32> to vector<16x1xf32>
    %52 = arith.mulf %48, %48 : vector<16x256xf32>
    %cst_15 = arith.constant dense<0.000000e+00> : vector<16xf32>
    %53 = vector.multi_reduction <add>, %52, %cst_15 [1] : vector<16x256xf32> to vector<16xf32>
    %54 = vector.shape_cast %53 : vector<16xf32> to vector<16x1xf32>
    %55 = arith.addf %51, %54 : vector<16x1xf32>
    %cst_16 = arith.constant 3.125000e-02 : f32
    %56 = vector.broadcast %cst_16 : f32 to vector<16x1xf32>
    %57 = arith.mulf %55, %56 : vector<16x1xf32>
    %cst_17 = arith.constant 9.99999974E-6 : f32
    %58 = vector.broadcast %cst_17 : f32 to vector<16x1xf32>
    %59 = arith.addf %57, %58 : vector<16x1xf32>
    %60 = math.rsqrt %59 : vector<16x1xf32>
    %61 = vector.broadcast %60 : vector<16x1xf32> to vector<16x256xf32>
    %62 = arith.mulf %44, %61 : vector<16x256xf32>
    %63 = arith.truncf %62 : vector<16x256xf32> to vector<16x256xbf16>
    %64 = vector.broadcast %60 : vector<16x1xf32> to vector<16x256xf32>
    %65 = arith.mulf %48, %64 : vector<16x256xf32>
    %66 = arith.truncf %65 : vector<16x256xf32> to vector<16x256xbf16>
    %c0_18 = arith.constant 0 : index
    %c0_19 = arith.constant 0 : index
    %c0_20 = arith.constant 0 : index
    %67 = vector.load %arg3[%c0_18, %c0_19, %c0_20] : memref<2x256x128xbf16, #tpu.memory_space<vmem>>, vector<1x256x128xbf16>
    %68 = vector.shape_cast %67 : vector<1x256x128xbf16> to vector<256x128xbf16>
    %cst_21 = arith.constant dense<0.000000e+00> : vector<16x128xf32>
    %69 = tpu.matmul %63, %68, %cst_21 {dimension_numbers = #tpu.dot_dimension_numbers<[1], [0], [0], [1], [0, 0, 1, 1], [], []>} : vector<16x256xbf16>, vector<256x128xbf16>, vector<16x128xf32> -> vector<16x128xf32>
    %c1_22 = arith.constant 1 : index
    %c0_23 = arith.constant 0 : index
    %c0_24 = arith.constant 0 : index
    %70 = vector.load %arg3[%c1_22, %c0_23, %c0_24] : memref<2x256x128xbf16, #tpu.memory_space<vmem>>, vector<1x256x128xbf16>
    %71 = vector.shape_cast %70 : vector<1x256x128xbf16> to vector<256x128xbf16>
    %cst_25 = arith.constant dense<0.000000e+00> : vector<16x128xf32>
    %72 = tpu.matmul %66, %71, %cst_25 {dimension_numbers = #tpu.dot_dimension_numbers<[1], [0], [0], [1], [0, 0, 1, 1], [], []>} : vector<16x256xbf16>, vector<256x128xbf16>, vector<16x128xf32> -> vector<16x128xf32>
    %73 = arith.addf %69, %72 : vector<16x128xf32>
    %c0_26 = arith.constant 0 : index
    %c0_27 = arith.constant 0 : index
    %74 = vector.load %arg4[%c0_26, %c0_27] : memref<1x128xf32, #tpu.memory_space<vmem>>, vector<1x128xf32>
    %75 = vector.broadcast %74 : vector<1x128xf32> to vector<16x128xf32>
    %76 = arith.addf %73, %75 : vector<16x128xf32>
    %77 = vector.shape_cast %76 : vector<16x128xf32> to vector<4x4x128xf32>
    %78 = arith.truncf %77 : vector<4x4x128xf32> to vector<4x4x128xbf16>
    %c0_28 = arith.constant 0 : index
    %79 = arith.index_cast %0 : i32 to index
    %c0_29 = arith.constant 0 : index
    %c0_30 = arith.constant 0 : index
    %80 = vector.load %arg5[%c0_28, %79, %c0_29, %c0_30] : memref<1x4x4x128xbf16, #tpu.memory_space<vmem>>, vector<1x4x4x128xbf16>
    %81 = vector.shape_cast %80 : vector<1x4x4x128xbf16> to vector<4x4x128xbf16>
    %82 = vector.shape_cast %78 : vector<4x4x128xbf16> to vector<1x4x4x128xbf16>
    tpu.vector_store %arg5[%c0_28, %79, %c0_29, %c0_30], %82 {strides = array<i32>} : memref<1x4x4x128xbf16, #tpu.memory_space<vmem>>, vector<1x4x4x128xbf16>,
    %c1_i32_31 = arith.constant 1 : i32
    return
  }
  func.func @transform_0(%arg0: i32, %arg1: i32) -> (i32, i32, i32, i32, i32) {
    %c0_i32 = arith.constant 0 : i32
    %c0_i32_0 = arith.constant 0 : i32
    %c0_i32_1 = arith.constant 0 : i32
    %c0_i32_2 = arith.constant 0 : i32
    return %arg0, %arg1, %c0_i32, %c0_i32_0, %c0_i32_1 : i32, i32, i32, i32, i32
  }
  func.func @transform_1(%arg0: i32, %arg1: i32) -> (i32, i32, i32) {
    %c0_i32 = arith.constant 0 : i32
    %c0_i32_0 = arith.constant 0 : i32
    %c0_i32_1 = arith.constant 0 : i32
    %c0_i32_2 = arith.constant 0 : i32
    return %c0_i32, %c0_i32_0, %c0_i32_1 : i32, i32, i32
  }
  func.func @transform_2(%arg0: i32, %arg1: i32) -> (i32, i32) {
    %c0_i32 = arith.constant 0 : i32
    %c0_i32_0 = arith.constant 0 : i32
    %c0_i32_1 = arith.constant 0 : i32
    return %c0_i32, %c0_i32_0 : i32, i32
  }
  func.func @transform_3(%arg0: i32, %arg1: i32) -> (i32, i32, i32, i32) {
    %c0_i32 = arith.constant 0 : i32
    %c0_i32_0 = arith.constant 0 : i32
    %c0_i32_1 = arith.constant 0 : i32
    return %arg0, %arg1, %c0_i32, %c0_i32_0 : i32, i32, i32, i32
  }
}

module attributes {stable_mosaic.version = 11 : i64} {
  func.func @_classifier_kernel(%arg0: i32, %arg1: i32, %arg2: memref<2x16x128xbf16, #tpu.memory_space<vmem>>, %arg3: memref<128x128xbf16, #tpu.memory_space<vmem>>, %arg4: memref<1x128xf32, #tpu.memory_space<vmem>>, %arg5: memref<2x128xf32, #tpu.memory_space<vmem>>, %arg6: memref<2x128xf32, #tpu.memory_space<vmem>>) attributes {dimension_semantics = [#tpu.dimension_semantics<parallel>, #tpu.dimension_semantics<arbitrary>], iteration_bounds = array<i64: 1, 1>, scalar_prefetch = 0 : i64, scratch_operands = 1 : i64, tpu.core_type = #tpu.core_type<tc>, window_params = [{transform_indices = @transform_0, window_bounds = array<i64: 2, 16, 128>}, {pipeline_mode = #tpu.pipeline_mode<synchronous>, transform_indices = @transform_1, window_bounds = array<i64: 128, 128>}, {pipeline_mode = #tpu.pipeline_mode<synchronous>, transform_indices = @transform_2, window_bounds = array<i64: 1, 128>}, {transform_indices = @transform_3, window_bounds = array<i64: 2, 128>}]} {
    %c0_i32 = arith.constant 0 : i32
    %0 = arith.cmpi eq, %arg1, %c0_i32 : i32
    %1 = arith.extui %0 : i1 to i32
    %c0_i32_0 = arith.constant 0 : i32
    %2 = arith.cmpi ne, %1, %c0_i32_0 : i32
    scf.if %2 {
      %cst_15 = arith.constant 0.000000e+00 : f32
      %35 = vector.broadcast %cst_15 : f32 to vector<2x128xf32>
      %c0_16 = arith.constant 0 : index
      %c0_17 = arith.constant 0 : index
      %36 = vector.load %arg6[%c0_16, %c0_17] : memref<2x128xf32, #tpu.memory_space<vmem>>, vector<2x128xf32>
      tpu.vector_store %arg6[%c0_16, %c0_17], %35 {strides = array<i32>} : memref<2x128xf32, #tpu.memory_space<vmem>>, vector<2x128xf32>,
    } else {
    }
    %c0 = arith.constant 0 : index
    %c0_1 = arith.constant 0 : index
    %c0_2 = arith.constant 0 : index
    %3 = vector.load %arg2[%c0, %c0_1, %c0_2] : memref<2x16x128xbf16, #tpu.memory_space<vmem>>, vector<2x16x128xbf16>
    %4 = arith.extf %3 : vector<2x16x128xbf16> to vector<2x16x128xf32>
    %cst = arith.constant dense<0.000000e+00> : vector<2x16xf32>
    %5 = vector.multi_reduction <add>, %4, %cst [2] : vector<2x16x128xf32> to vector<2x16xf32>
    %6 = vector.shape_cast %5 : vector<2x16xf32> to vector<2x16x1xf32>
    %cst_3 = arith.constant 6.250000e-02 : f32
    %7 = vector.broadcast %cst_3 : f32 to vector<2x16x1xf32>
    %8 = arith.mulf %6, %7 : vector<2x16x1xf32>
    %9 = vector.broadcast %8 : vector<2x16x1xf32> to vector<2x16x128xf32>
    %10 = arith.subf %4, %9 : vector<2x16x128xf32>
    %11 = tpu.iota {dimensions = array<i32: 2>} : vector<1x1x128xi32>
    %c16_i32 = arith.constant 16 : i32
    %12 = vector.broadcast %c16_i32 : i32 to vector<1x1x128xi32>
    %13 = arith.cmpi slt, %11, %12 : vector<1x1x128xi32>
    %cst_4 = arith.constant 0.000000e+00 : f32
    %14 = vector.shape_cast %13 : vector<1x1x128xi1> to vector<1x1x128xi1>
    %15 = vector.broadcast %14 : vector<1x1x128xi1> to vector<2x16x128xi1>
    %16 = vector.broadcast %cst_4 : f32 to vector<2x16x128xf32>
    %17 = arith.select %15, %10, %16 : vector<2x16x128xi1>, vector<2x16x128xf32>
    %18 = arith.mulf %17, %17 : vector<2x16x128xf32>
    %cst_5 = arith.constant dense<0.000000e+00> : vector<2x16xf32>
    %19 = vector.multi_reduction <add>, %18, %cst_5 [2] : vector<2x16x128xf32> to vector<2x16xf32>
    %20 = vector.shape_cast %19 : vector<2x16xf32> to vector<2x16x1xf32>
    %cst_6 = arith.constant 6.250000e-02 : f32
    %21 = vector.broadcast %cst_6 : f32 to vector<2x16x1xf32>
    %22 = arith.mulf %20, %21 : vector<2x16x1xf32>
    %cst_7 = arith.constant 9.99999974E-6 : f32
    %23 = vector.broadcast %cst_7 : f32 to vector<2x16x1xf32>
    %24 = arith.addf %22, %23 : vector<2x16x1xf32>
    %25 = math.rsqrt %24 : vector<2x16x1xf32>
    %26 = vector.broadcast %25 : vector<2x16x1xf32> to vector<2x16x128xf32>
    %27 = arith.mulf %17, %26 : vector<2x16x128xf32>
    %c0_8 = arith.constant 0 : index
    %c0_9 = arith.constant 0 : index
    %28 = vector.load %arg6[%c0_8, %c0_9] : memref<2x128xf32, #tpu.memory_space<vmem>>, vector<2x128xf32>
    %cst_10 = arith.constant dense<0.000000e+00> : vector<2x128xf32>
    %29 = vector.multi_reduction <add>, %27, %cst_10 [1] : vector<2x16x128xf32> to vector<2x128xf32>
    %30 = arith.addf %28, %29 : vector<2x128xf32>
    %c0_11 = arith.constant 0 : index
    %c0_12 = arith.constant 0 : index
    %31 = vector.load %arg6[%c0_11, %c0_12] : memref<2x128xf32, #tpu.memory_space<vmem>>, vector<2x128xf32>
    tpu.vector_store %arg6[%c0_11, %c0_12], %30 {strides = array<i32>} : memref<2x128xf32, #tpu.memory_space<vmem>>, vector<2x128xf32>,
    %c0_i32_13 = arith.constant 0 : i32
    %32 = arith.cmpi eq, %arg1, %c0_i32_13 : i32
    %33 = arith.extui %32 : i1 to i32
    %c0_i32_14 = arith.constant 0 : i32
    %34 = arith.cmpi ne, %33, %c0_i32_14 : i32
    scf.if %34 {
      %c0_15 = arith.constant 0 : index
      %c0_16 = arith.constant 0 : index
      %35 = vector.load %arg6[%c0_15, %c0_16] : memref<2x128xf32, #tpu.memory_space<vmem>>, vector<2x128xf32>
      %cst_17 = arith.constant 6.250000e-02 : f32
      %36 = vector.broadcast %cst_17 : f32 to vector<2x128xf32>
      %37 = arith.mulf %35, %36 : vector<2x128xf32>
      %38 = arith.truncf %37 : vector<2x128xf32> to vector<2x128xbf16>
      %c0_18 = arith.constant 0 : index
      %c0_19 = arith.constant 0 : index
      %39 = vector.load %arg3[%c0_18, %c0_19] : memref<128x128xbf16, #tpu.memory_space<vmem>>, vector<128x128xbf16>
      %cst_20 = arith.constant dense<0.000000e+00> : vector<2x128xf32>
      %40 = tpu.matmul %38, %39, %cst_20 {dimension_numbers = #tpu.dot_dimension_numbers<[1], [0], [0], [1], [0, 0, 1, 1], [], []>} : vector<2x128xbf16>, vector<128x128xbf16>, vector<2x128xf32> -> vector<2x128xf32>
      %c0_21 = arith.constant 0 : index
      %c0_22 = arith.constant 0 : index
      %41 = vector.load %arg4[%c0_21, %c0_22] : memref<1x128xf32, #tpu.memory_space<vmem>>, vector<1x128xf32>
      %42 = vector.broadcast %41 : vector<1x128xf32> to vector<2x128xf32>
      %43 = arith.addf %40, %42 : vector<2x128xf32>
      %c0_23 = arith.constant 0 : index
      %c0_24 = arith.constant 0 : index
      %44 = vector.load %arg5[%c0_23, %c0_24] : memref<2x128xf32, #tpu.memory_space<vmem>>, vector<2x128xf32>
      tpu.vector_store %arg5[%c0_23, %c0_24], %43 {strides = array<i32>} : memref<2x128xf32, #tpu.memory_space<vmem>>, vector<2x128xf32>,
    } else {
    }
    return
  }
  func.func @transform_0(%arg0: i32, %arg1: i32) -> (i32, i32, i32) {
    %c0_i32 = arith.constant 0 : i32
    %c0_i32_0 = arith.constant 0 : i32
    return %arg0, %arg1, %c0_i32 : i32, i32, i32
  }
  func.func @transform_1(%arg0: i32, %arg1: i32) -> (i32, i32) {
    %c0_i32 = arith.constant 0 : i32
    %c0_i32_0 = arith.constant 0 : i32
    %c0_i32_1 = arith.constant 0 : i32
    return %c0_i32, %c0_i32_0 : i32, i32
  }
  func.func @transform_2(%arg0: i32, %arg1: i32) -> (i32, i32) {
    %c0_i32 = arith.constant 0 : i32
    %c0_i32_0 = arith.constant 0 : i32
    %c0_i32_1 = arith.constant 0 : i32
    return %c0_i32, %c0_i32_0 : i32, i32
  }
  func.func @transform_3(%arg0: i32, %arg1: i32) -> (i32, i32) {
    %c0_i32 = arith.constant 0 : i32
    %c0_i32_0 = arith.constant 0 : i32
    return %arg0, %c0_i32 : i32, i32
  }
}

</mosaic_0001>

<llo_original>
// kernel: tpu_custom_call.1
$region0: #{tpu_custom_call.1}
  #allocation0 [shape = 'u32[]', space=smem, size = 0x4, offset = 0x4, fixed_abs, tag = 'smem constant byte address 0x4 - core index']
  #allocation1 [shape = 'u32[72,128]{1,0:T(1,128)}', space=vmem, size = 0x9000, scoped, tag = 'internal scratch']
  %s0 = inlined_call_operand.hbm [shape: f32[8,128], index: 0, kind: input, shape index: {}]
  %s1 = inlined_call_operand.hbm [shape: f32[8,128], index: 1, kind: output, shape index: {}]
  %s2 = sld [smem:[#allocation0]]
  $region41: #{tpu_custom_call.1} parent=0
    _
  %s4 = ssub.s32 1, %s2
  %s5 = scalar_select 0, %s4, %s2
  $region1: #{tpu_custom_call.1} parent=0
    #allocation2 [shape = 'u8[4096]{0}', space=vmem, size = 0x1000, scoped, tag = 'input window, operand 0, single buffered']
    #allocation3 [shape = 's32[2]{0}', space=sflag, size = 0x8, scoped, tag = 'scoped memory for tpu_custom_call.1']
    #allocation4 [shape = 's32[2]{0}', space=sflag, size = 0x8, scoped, tag = 'scoped memory for tpu_custom_call.1']
    #allocation5 [shape = 'u8[4096]{0}', space=vmem, size = 0x1000, scoped, tag = 'output window, operand 0, single buffered']
    %6 = vsyncpa [#allocation3], 0
    %7 = vsyncpa [#allocation4], 0
    loop: start=0, step=1, limit=4
    $region2: #{tpu_custom_call.1} parent=1 // loop_pre_header
      _
    $region3: #{tpu_custom_call.1} parent=1 // loop_header
      %s9 = sphi 0, %s13
      %p10 = scmp.ge.s32.totalorder %s9, 4
      %s17 = sphi 0, %s17
      %s19 = sphi 0, %s17
      %s20 = sphi 0, %s19
      %s34 = sphi 0, %s20
      %s38 = sphi 0, %s38
      %s40 = sphi 0, %s38
      %s41 = sphi 0, %s40
      %s55 = sphi 0, %s41
    $region4: #{tpu_custom_call.1} parent=1 // loop_header_branch
      %12 = sbr.rel (%p10) target = $region8
    $region5: #{tpu_custom_call.1} parent=1 // loop_body
      %s14 = ssub.s32 %s9, 1
      %s15 = ssub.s32 %s9, 2
      %s16 = sadd.s32 %s9, 1
      %s18 = sadd.s32 %s17, 1
      %p21 = scmp.eq.s32.totalorder %s9, 1
      %p22 = scmp.ne.s32.totalorder %s17, %s19
      %p23 = scmp.eq.s32.totalorder %s9, 0
      %p24 = por %p22, %p23
      %p25 = scmp.ne.s32.totalorder %s17, %s19
      %p26 = scmp.eq.s32.totalorder %s14, 1
      %p27 = por %p25, %p26
      %p28 = scmp.ne.s32.totalorder %s19, %s20
      %p29 = scmp.eq.s32.totalorder %s14, 0
      %p30 = por %p28, %p29
      %p31 = scmp.ne.s32.totalorder %s19, %s20
      %p32 = scmp.eq.s32.totalorder %s15, 1
      %p33 = por %p31, %p32
      %p35 = scmp.ne.s32.totalorder %s20, %s34
      %p36 = scmp.eq.s32.totalorder %s15, 0
      %p37 = por %p35, %p36
      %s39 = sadd.s32 %s38, 1
      %p42 = scmp.eq.s32.totalorder %s9, 1
      %p43 = scmp.ne.s32.totalorder %s38, %s40
      %p44 = scmp.eq.s32.totalorder %s9, 0
      %p45 = por %p43, %p44
      %p46 = scmp.ne.s32.totalorder %s38, %s40
      %p47 = scmp.eq.s32.totalorder %s14, 1
      %p48 = por %p46, %p47
      %p49 = scmp.ne.s32.totalorder %s40, %s41
      %p50 = scmp.eq.s32.totalorder %s14, 0
      %p51 = por %p49, %p50
      %p52 = scmp.ne.s32.totalorder %s40, %s41
      %p53 = scmp.eq.s32.totalorder %s15, 1
      %p54 = por %p52, %p53
      %p56 = scmp.ne.s32.totalorder %s41, %s55
      %p57 = scmp.eq.s32.totalorder %s15, 0
      %p58 = por %p56, %p57
      %p59 = scmp.le.s32.totalorder 1, %s9
      %p60 = scmp.lt.s32.totalorder %s9, 3
      %p61 = pnand %p59, %p60
      %p62 = pneg %p61
      // Predicated region
      $region9: #{tpu_custom_call.1} parent=5 // pred_check
        _
      $region10: #{tpu_custom_call.1} parent=5 // pred_check_branch
        %64 = sbr.rel (%p61) target = $region12
      $region11: #{tpu_custom_call.1} parent=5 // pred_region
        %s65 = ssub.s32 %s9, 1
        // Predicated region
        $region13: #{tpu_custom_call.1} parent=11 // pred_check
          %p66 = pneg %p30
        $region14: #{tpu_custom_call.1} parent=11 // pred_check_branch
          %68 = sbr.rel (%p66) target = $region16
        $region15: #{tpu_custom_call.1} parent=11 // pred_region
          %70 = vsyncadd [#allocation3], 0
          %s72 = sshll.u32 %s0, 4
          %s73 = int_to_ptr.hbm [resolvable:$true] %s72
          %s74 = sshll.u32 [#allocation2], 4
          %s75 = int_to_ptr.vmem [resolvable:$true] %s74
          %77 = dma.hbm_to_vmem [thread:$0]  %s73, 128, %s75, [#allocation3]
        $region16: #{tpu_custom_call.1} parent=11 // pred_fallthru
          _
      $region12: #{tpu_custom_call.1} parent=5 // pred_fallthru
        _
      %p78 = scmp.lt.s32.totalorder %s9, 2
      // Predicated region
      $region17: #{tpu_custom_call.1} parent=5 // pred_check
        %p79 = pneg %p78
      $region18: #{tpu_custom_call.1} parent=5 // pred_check_branch
        %81 = sbr.rel (%p79) target = $region20
      $region19: #{tpu_custom_call.1} parent=5 // pred_region
        _
      $region20: #{tpu_custom_call.1} parent=5 // pred_fallthru
        _
      %p82 = scmp.le.s32.totalorder 1, %s9
      %p83 = scmp.lt.s32.totalorder %s9, 3
      %p84 = pnand %p82, %p83
      %p85 = pneg %p84
      // Predicated region
      $region21: #{tpu_custom_call.1} parent=5 // pred_check
        _
      $region22: #{tpu_custom_call.1} parent=5 // pred_check_branch
        %87 = sbr.rel (%p84) target = $region24
      $region23: #{tpu_custom_call.1} parent=5 // pred_region
        %s88 = ssub.s32 %s9, 1
        // Predicated region
        $region25: #{tpu_custom_call.1} parent=23 // pred_check
          %p89 = pneg %p30
        $region26: #{tpu_custom_call.1} parent=23 // pred_check_branch
          %91 = sbr.rel (%p89) target = $region28
        $region27: #{tpu_custom_call.1} parent=23 // pred_region
          %93 = dma.done [#allocation3], 128
        $region28: #{tpu_custom_call.1} parent=23 // pred_fallthru
          _
        %p94 = pneg %p30
        %p95 = pneg %p27
        %p96 = pneg %p51
        %p97 = pneg %p48
        %v98 = vld [vmem:[#allocation2] sm:$0xff]
        %v99 = vadd.f32 %v98, 1.0
        %100 = vst [vmem:[#allocation5] sm:$0xff] %v99
        // Predicated region
        $region29: #{tpu_custom_call.1} parent=23 // pred_check
          %p101 = pneg %p48
        $region30: #{tpu_custom_call.1} parent=23 // pred_check_branch
          %103 = sbr.rel (%p101) target = $region32
        $region31: #{tpu_custom_call.1} parent=23 // pred_region
          %105 = vsyncadd [#allocation4], 0
          %s107 = sshll.u32 [#allocation5], 4
          %s108 = int_to_ptr.vmem [resolvable:$true] %s107
          %s109 = sshll.u32 %s1, 4
          %s110 = int_to_ptr.hbm [resolvable:$true] %s109
          %112 = dma.vmem_to_hbm [thread:$0]  %s108, 128, %s110, [#allocation4]
        $region32: #{tpu_custom_call.1} parent=23 // pred_fallthru
          _
        // Predicated region
        $region33: #{tpu_custom_call.1} parent=23 // pred_check
          %p113 = pneg %p48
        $region34: #{tpu_custom_call.1} parent=23 // pred_check_branch
          %115 = sbr.rel (%p113) target = $region36
        $region35: #{tpu_custom_call.1} parent=23 // pred_region
          %117 = dma.done [#allocation4], 128
        $region36: #{tpu_custom_call.1} parent=23 // pred_fallthru
          _
      $region24: #{tpu_custom_call.1} parent=5 // pred_fallthru
        _
      %p118 = scmp.le.s32.totalorder 2, %s9
      // Predicated region
      $region37: #{tpu_custom_call.1} parent=5 // pred_check
        %p119 = pneg %p118
      $region38: #{tpu_custom_call.1} parent=5 // pred_check_branch
        %121 = sbr.rel (%p119) target = $region40
      $region39: #{tpu_custom_call.1} parent=5 // pred_region
        %s122 = ssub.s32 %s9, 2
      $region40: #{tpu_custom_call.1} parent=5 // pred_fallthru
        _
    $region6: #{tpu_custom_call.1} parent=1 // loop_footer
      %s13 = sadd.s32 1, %s9
    $region7: #{tpu_custom_call.1} parent=1 // loop_footer_branch
      %8 = sbr.rel target = $region3
    $region8: #{tpu_custom_call.1} parent=1 // loop_exit
      _
    %123 = vsyncpa [#allocation3], 1
    %s124 = scalar_lea.sflag [#allocation3], 1
    %125 = vsyncpa %s124, 1
    %126 = vsyncpa [#allocation4], 1
    %s127 = scalar_lea.sflag [#allocation4], 1
    %128 = vsyncpa %s127, 1

// kernel: super_mamba_forward.3
$region0: #{super_mamba_forward.3}
  #allocation0 [shape = 'u32[]', space=smem, size = 0x4, offset = 0x4, fixed_abs, tag = 'smem constant byte address 0x4 - core index']
  #allocation1 [shape = 'u32[72,128]{1,0:T(1,128)}', space=vmem, size = 0x9000, scoped, tag = 'internal scratch']
  %s0 = inlined_call_operand.vmem [shape: bf16[2,8,2,8,8], index: 0, kind: input, shape index: {}]
  %s1 = inlined_call_operand.vmem [shape: bf16[2,8,128], index: 1, kind: input, shape index: {}]
  %s2 = inlined_call_operand.vmem [shape: f32[1,128], index: 2, kind: input, shape index: {}]
  %s3 = inlined_call_operand.vmem [shape: bf16[2,8,8,128], index: 3, kind: output, shape index: {}]
  %s4 = sld [smem:[#allocation0]]
  $region45: #{super_mamba_forward.3} parent=0
    _
  %s6 = ssub.s32 1, %s4
  %s7 = scalar_select 0, %s6, %s4
  loop: start=0, step=1, limit=4
  $region2: #{super_mamba_forward.3} parent=0 // loop_pre_header
    _
  $region3: #{super_mamba_forward.3} parent=0 // loop_header
    %s9 = sphi 0, %s13
    %p10 = scmp.ge.s32.totalorder %s9, 4
    %s16 = sphi 0, %s28
    %s17 = sphi 0, %s24
    %s18 = sphi 0, %s16
    %s19 = sphi 0, %s17
    %s20 = sphi 0, %s18
    %s21 = sphi 0, %s19
    %s33 = sphi 0, %s35
    %s36 = sphi 0, %s33
    %s37 = sphi 0, %s36
    %s53 = sphi 0, %s37
    %s57 = sphi 0, %s57
    %s59 = sphi 0, %s57
    %s60 = sphi 0, %s59
    %s74 = sphi 0, %s60
    %s78 = sphi 0, %s78
    %s80 = sphi 0, %s78
    %s81 = sphi 0, %s80
    %s95 = sphi 0, %s81
    %s103 = sphi 0, %s105
    %s106 = sphi 0, %s103
    %s107 = sphi 0, %s106
    %s123 = sphi 0, %s107
  $region4: #{super_mamba_forward.3} parent=0 // loop_header_branch
    %12 = sbr.rel (%p10) target = $region8
  $region5: #{super_mamba_forward.3} parent=0 // loop_body
    %s14 = ssub.s32 %s9, 1
    %s15 = ssub.s32 %s9, 2
    %s22 = sadd.s32 1, %s17
    %p23 = scmp.ge.s32.totalorder %s22, 1
    %s24 = scalar_select %p23, 0, %s22
    %s25 = sadd.s32 1, %s16
    %s26 = scalar_select %p23, %s25, %s16
    %p27 = scmp.ge.s32.totalorder %s26, 2
    %s28 = scalar_select %p27, 0, %s26
    %s29 = ssub.s32 %s16, %s28
    %s30 = ssub.s32 %s17, %s24
    %s31 = sor.u32 %s29, %s30
    %p32 = scmp.eq.s32.totalorder %s31, 0
    %s34 = sadd.s32 %s33, 1
    %s35 = scalar_select %p32, %s33, %s34
    %p38 = pneg %p32
    %p39 = scmp.eq.s32.totalorder %s9, 1
    %p40 = por %p38, %p39
    %p41 = scmp.ne.s32.totalorder %s33, %s36
    %p42 = scmp.eq.s32.totalorder %s9, 0
    %p43 = por %p41, %p42
    %p44 = scmp.ne.s32.totalorder %s33, %s36
    %p45 = scmp.eq.s32.totalorder %s14, 1
    %p46 = por %p44, %p45
    %p47 = scmp.ne.s32.totalorder %s36, %s37
    %p48 = scmp.eq.s32.totalorder %s14, 0
    %p49 = por %p47, %p48
    %p50 = scmp.ne.s32.totalorder %s36, %s37
    %p51 = scmp.eq.s32.totalorder %s15, 1
    %p52 = por %p50, %p51
    %p54 = scmp.ne.s32.totalorder %s37, %s53
    %p55 = scmp.eq.s32.totalorder %s15, 0
    %p56 = por %p54, %p55
    %s58 = sadd.s32 %s57, 1
    %p61 = scmp.eq.s32.totalorder %s9, 1
    %p62 = scmp.ne.s32.totalorder %s57, %s59
    %p63 = scmp.eq.s32.totalorder %s9, 0
    %p64 = por %p62, %p63
    %p65 = scmp.ne.s32.totalorder %s57, %s59
    %p66 = scmp.eq.s32.totalorder %s14, 1
    %p67 = por %p65, %p66
    %p68 = scmp.ne.s32.totalorder %s59, %s60
    %p69 = scmp.eq.s32.totalorder %s14, 0
    %p70 = por %p68, %p69
    %p71 = scmp.ne.s32.totalorder %s59, %s60
    %p72 = scmp.eq.s32.totalorder %s15, 1
    %p73 = por %p71, %p72
    %p75 = scmp.ne.s32.totalorder %s60, %s74
    %p76 = scmp.eq.s32.totalorder %s15, 0
    %p77 = por %p75, %p76
    %s79 = sadd.s32 %s78, 1
    %p82 = scmp.eq.s32.totalorder %s9, 1
    %p83 = scmp.ne.s32.totalorder %s78, %s80
    %p84 = scmp.eq.s32.totalorder %s9, 0
    %p85 = por %p83, %p84
    %p86 = scmp.ne.s32.totalorder %s78, %s80
    %p87 = scmp.eq.s32.totalorder %s14, 1
    %p88 = por %p86, %p87
    %p89 = scmp.ne.s32.totalorder %s80, %s81
    %p90 = scmp.eq.s32.totalorder %s14, 0
    %p91 = por %p89, %p90
    %p92 = scmp.ne.s32.totalorder %s80, %s81
    %p93 = scmp.eq.s32.totalorder %s15, 1
    %p94 = por %p92, %p93
    %p96 = scmp.ne.s32.totalorder %s81, %s95
    %p97 = scmp.eq.s32.totalorder %s15, 0
    %p98 = por %p96, %p97
    %s99 = ssub.s32 %s16, %s28
    %s100 = ssub.s32 %s17, %s24
    %s101 = sor.u32 %s99, %s100
    %p102 = scmp.eq.s32.totalorder %s101, 0
    %s104 = sadd.s32 %s103, 1
    %s105 = scalar_select %p102, %s103, %s104
    %p108 = pneg %p102
    %p109 = scmp.eq.s32.totalorder %s9, 1
    %p110 = por %p108, %p109
    %p111 = scmp.ne.s32.totalorder %s103, %s106
    %p112 = scmp.eq.s32.totalorder %s9, 0
    %p113 = por %p111, %p112
    %p114 = scmp.ne.s32.totalorder %s103, %s106
    %p115 = scmp.eq.s32.totalorder %s14, 1
    %p116 = por %p114, %p115
    %p117 = scmp.ne.s32.totalorder %s106, %s107
    %p118 = scmp.eq.s32.totalorder %s14, 0
    %p119 = por %p117, %p118
    %p120 = scmp.ne.s32.totalorder %s106, %s107
    %p121 = scmp.eq.s32.totalorder %s15, 1
    %p122 = por %p120, %p121
    %p124 = scmp.ne.s32.totalorder %s107, %s123
    %p125 = scmp.eq.s32.totalorder %s15, 0
    %p126 = por %p124, %p125
    %p127 = scmp.le.s32.totalorder 1, %s9
    %p128 = scmp.lt.s32.totalorder %s9, 3
    %p129 = pnand %p127, %p128
    %p130 = pneg %p129
    // Predicated region
    $region9: #{super_mamba_forward.3} parent=5 // pred_check
      _
    $region10: #{super_mamba_forward.3} parent=5 // pred_check_branch
      %132 = sbr.rel (%p129) target = $region12
    $region11: #{super_mamba_forward.3} parent=5 // pred_region
      %s133 = ssub.s32 %s9, 1
      // Predicated region
      $region13: #{super_mamba_forward.3} parent=11 // pred_check
        %p134 = pneg %p70
      $region14: #{super_mamba_forward.3} parent=11 // pred_check_branch
        %136 = sbr.rel (%p134) target = $region16
      $region15: #{super_mamba_forward.3} parent=11 // pred_region
        _
      $region16: #{super_mamba_forward.3} parent=11 // pred_fallthru
        _
      // Predicated region
      $region17: #{super_mamba_forward.3} parent=11 // pred_check
        %p137 = pneg %p91
      $region18: #{super_mamba_forward.3} parent=11 // pred_check_branch
        %139 = sbr.rel (%p137) target = $region20
      $region19: #{super_mamba_forward.3} parent=11 // pred_region
        _
      $region20: #{super_mamba_forward.3} parent=11 // pred_fallthru
        _
    $region12: #{super_mamba_forward.3} parent=5 // pred_fallthru
      _
    %p140 = scmp.lt.s32.totalorder %s9, 2
    // Predicated region
    $region21: #{super_mamba_forward.3} parent=5 // pred_check
      %p141 = pneg %p140
    $region22: #{super_mamba_forward.3} parent=5 // pred_check_branch
      %143 = sbr.rel (%p141) target = $region24
    $region23: #{super_mamba_forward.3} parent=5 // pred_region
      // Predicated region
      $region25: #{super_mamba_forward.3} parent=23 // pred_check
        %p144 = pneg %p43
      $region26: #{super_mamba_forward.3} parent=23 // pred_check_branch
        %146 = sbr.rel (%p144) target = $region28
      $region27: #{super_mamba_forward.3} parent=23 // pred_region
        %s147 = smul.u32 8, %s17
        %p148 = scmp.lt.s32.totalorder %s16, 1
        %s149 = scalar_select %p148, %s16, 1
        %p150 = scmp.lt.s32.totalorder %s147, 7
        %s151 = scalar_select %p150, %s147, 7
        %s152 = smul.addr %s151, 2
        %s153 = smul.addr %s149, 16
        %s154 = sadd.s32 %s152, %s153
        %s155 = smul.addr %s154, 4
        %s156 = scalar_lea.vmem %s0, %s155
        %s157 = smul.u32 8, %s17
      $region28: #{super_mamba_forward.3} parent=23 // pred_fallthru
        _
    $region24: #{super_mamba_forward.3} parent=5 // pred_fallthru
      _
    %p158 = scmp.le.s32.totalorder 1, %s9
    %p159 = scmp.lt.s32.totalorder %s9, 3
    %p160 = pnand %p158, %p159
    %p161 = pneg %p160
    // Predicated region
    $region29: #{super_mamba_forward.3} parent=5 // pred_check
      _
    $region30: #{super_mamba_forward.3} parent=5 // pred_check_branch
      %163 = sbr.rel (%p160) target = $region32
    $region31: #{super_mamba_forward.3} parent=5 // pred_region
      %s164 = ssub.s32 %s9, 1
      %s165 = smul.u32 8, %s19
      %p166 = scmp.lt.s32.totalorder %s18, 1
      %s167 = scalar_select %p166, %s18, 1
      %p168 = scmp.lt.s32.totalorder %s165, 7
      %s169 = scalar_select %p168, %s165, 7
      %s170 = smul.addr %s169, 2
      %s171 = smul.addr %s167, 16
      %s172 = sadd.s32 %s170, %s171
      %s173 = smul.addr %s172, 4
      %s174 = scalar_lea.vmem %s0, %s173
      %p175 = pneg %p49
      %p176 = pneg %p46
      %p177 = pneg %p70
      %p178 = pneg %p67
      %p179 = pneg %p91
      %p180 = pneg %p88
      %p181 = pneg %p119
      %p182 = pneg %p116
      %s183 = smul.u32 8, %s19
      %p184 = scmp.lt.s32.totalorder %s18, 1
      %s185 = scalar_select %p184, %s18, 1
      %p186 = scmp.lt.s32.totalorder %s183, 7
      %s187 = scalar_select %p186, %s183, 7
      %s188 = smul.addr %s185, 8
      %s189 = sadd.s32 %s187, %s188
      %s190 = smul.addr %s189, 4
      %s191 = scalar_lea.vmem %s3, %s190
      %s192 = smul.u32 8, %s19
      %p193 = scmp.lt.s32.totalorder %s18, 1
      %s194 = scalar_select %p193, %s18, 1
      %p195 = scmp.lt.s32.totalorder %s192, 7
      %s196 = scalar_select %p195, %s192, 7
      %s197 = smul.addr %s196, 2
      %s198 = smul.addr %s194, 16
      %s199 = sadd.s32 %s197, %s198
      %s200 = smul.addr %s199, 4
      %s201 = scalar_lea.vmem %s0, %s200
      %s202 = smul.u32 8, %s19
      %s203 = smul.u32 8, %s19
      %p204 = scmp.lt.s32.totalorder %s18, 1
      %s205 = scalar_select %p204, %s18, 1
      %p206 = scmp.lt.s32.totalorder %s203, 7
      %s207 = scalar_select %p206, %s203, 7
      %s208 = smul.addr %s205, 8
      %s209 = sadd.s32 %s207, %s208
      %s210 = smul.addr %s209, 4
      %s211 = scalar_lea.vmem %s3, %s210
      %s212 = smul.u32 8, %s19
      %s214 = smul.u32 0, 2
      %s215 = smul.addr %s214, 4
      %s216 = scalar_lea.vmem %s201, %s215
      %v217 = vld [vmem:[%s216] sm:$0xf]
      %v218 = vld [vmem:[%s216 + $0x8] sm:$0xf]
      %v219 = vld [vmem:[%s216 + $0x10] sm:$0xf]
      %v220 = vld [vmem:[%s216 + $0x18] sm:$0xf]
      %v221 = vld [vmem:[%s216 + $0x20] sm:$0xf]
      %v222 = vld [vmem:[%s216 + $0x28] sm:$0xf]
      %v223 = vld [vmem:[%s216 + $0x30] sm:$0xf]
      %v224 = vld [vmem:[%s216 + $0x38] sm:$0xf]
      %v225 = vunpack.c.l.bf16 %v217
      %v226 = vunpack.c.l.bf16 %v218
      %v227 = vunpack.c.l.bf16 %v219
      %v228 = vunpack.c.l.bf16 %v220
      %v229 = vunpack.c.l.bf16 %v221
      %v230 = vunpack.c.l.bf16 %v222
      %v231 = vunpack.c.l.bf16 %v223
      %v232 = vunpack.c.l.bf16 %v224
      %s233 = sadd.s32 1, %s214
      %s234 = smul.addr %s233, 4
      %s235 = scalar_lea.vmem %s201, %s234
      %v236 = vld [vmem:[%s235] sm:$0xf]
      %v237 = vld [vmem:[%s235 + $0x8] sm:$0xf]
      %v238 = vld [vmem:[%s235 + $0x10] sm:$0xf]
      %v239 = vld [vmem:[%s235 + $0x18] sm:$0xf]
      %v240 = vld [vmem:[%s235 + $0x20] sm:$0xf]
      %v241 = vld [vmem:[%s235 + $0x28] sm:$0xf]
      %v242 = vld [vmem:[%s235 + $0x30] sm:$0xf]
      %v243 = vld [vmem:[%s235 + $0x38] sm:$0xf]
      %v244 = vunpack.c.l.bf16 %v236
      %v245 = vunpack.c.l.bf16 %v237
      %v246 = vunpack.c.l.bf16 %v238
      %v247 = vunpack.c.l.bf16 %v239
      %v248 = vunpack.c.l.bf16 %v240
      %v249 = vunpack.c.l.bf16 %v241
      %v250 = vunpack.c.l.bf16 %v242
      %v251 = vunpack.c.l.bf16 %v243
      %vm252 = vcmask 64512
      %v253 = vsel %vm252, %v225, 0.0
      %254 = vadd.xlane.f32.xlu0 %v253
      %v255 = vpop.xlane.xlu0 %254
      %v256 = vsel %vm252, %v226, 0.0
      %257 = vadd.xlane.f32.xlu0 %v256
      %v258 = vpop.xlane.xlu0 %257
      %v259 = vsel %vm252, %v227, 0.0
      %260 = vadd.xlane.f32.xlu0 %v259
      %v261 = vpop.xlane.xlu0 %260
      %v262 = vsel %vm252, %v228, 0.0
      %263 = vadd.xlane.f32.xlu0 %v262
      %v264 = vpop.xlane.xlu0 %263
      %v265 = vsel %vm252, %v229, 0.0
      %266 = vadd.xlane.f32.xlu0 %v265
      %v267 = vpop.xlane.xlu0 %266
      %v268 = vsel %vm252, %v230, 0.0
      %269 = vadd.xlane.f32.xlu0 %v268
      %v270 = vpop.xlane.xlu0 %269
      %v271 = vsel %vm252, %v231, 0.0
      %272 = vadd.xlane.f32.xlu0 %v271
      %v273 = vpop.xlane.xlu0 %272
      %v274 = vsel %vm252, %v232, 0.0
      %275 = vadd.xlane.f32.xlu0 %v274
      %v276 = vpop.xlane.xlu0 %275
      %v277 = vsel %vm252, %v244, 0.0
      %278 = vadd.xlane.f32.xlu0 %v277
      %v279 = vpop.xlane.xlu0 %278
      %v280 = vsel %vm252, %v245, 0.0
      %281 = vadd.xlane.f32.xlu0 %v280
      %v282 = vpop.xlane.xlu0 %281
      %v283 = vsel %vm252, %v246, 0.0
      %284 = vadd.xlane.f32.xlu0 %v283
      %v285 = vpop.xlane.xlu0 %284
      %v286 = vsel %vm252, %v247, 0.0
      %287 = vadd.xlane.f32.xlu0 %v286
      %v288 = vpop.xlane.xlu0 %287
      %v289 = vsel %vm252, %v248, 0.0
      %290 = vadd.xlane.f32.xlu0 %v289
      %v291 = vpop.xlane.xlu0 %290
      %v292 = vsel %vm252, %v249, 0.0
      %293 = vadd.xlane.f32.xlu0 %v292
      %v294 = vpop.xlane.xlu0 %293
      %v295 = vsel %vm252, %v250, 0.0
      %296 = vadd.xlane.f32.xlu0 %v295
      %v297 = vpop.xlane.xlu0 %296
      %v298 = vsel %vm252, %v251, 0.0
      %299 = vadd.xlane.f32.xlu0 %v298
      %v300 = vpop.xlane.xlu0 %299
      %v301 = vadd.f32 %v255, %v279
      %v302 = vadd.f32 %v258, %v282
      %v303 = vadd.f32 %v261, %v285
      %v304 = vadd.f32 %v264, %v288
      %v305 = vadd.f32 %v267, %v291
      %v306 = vadd.f32 %v270, %v294
      %v307 = vadd.f32 %v273, %v297
      %v308 = vadd.f32 %v276, %v300
      %v309 = vmul.f32 %v301, 0.0625
      %v310 = vmul.f32 %v302, 0.0625
      %v311 = vmul.f32 %v303, 0.0625
      %v312 = vmul.f32 %v304, 0.0625
      %v313 = vmul.f32 %v305, 0.0625
      %v314 = vmul.f32 %v306, 0.0625
      %v315 = vmul.f32 %v307, 0.0625
      %v316 = vmul.f32 %v308, 0.0625
      %v317 = vsub.f32 %v225, %v309
      %v318 = vsub.f32 %v226, %v310
      %v319 = vsub.f32 %v227, %v311
      %v320 = vsub.f32 %v228, %v312
      %v321 = vsub.f32 %v229, %v313
      %v322 = vsub.f32 %v230, %v314
      %v323 = vsub.f32 %v231, %v315
      %v324 = vsub.f32 %v232, %v316
      %v325 = vsub.f32 %v244, %v309
      %v326 = vsub.f32 %v245, %v310
      %v327 = vsub.f32 %v246, %v311
      %v328 = vsub.f32 %v247, %v312
      %v329 = vsub.f32 %v248, %v313
      %v330 = vsub.f32 %v249, %v314
      %v331 = vsub.f32 %v250, %v315
      %v332 = vsub.f32 %v251, %v316
      %v333 = vmul.f32 %v317, %v317
      %v334 = vmul.f32 %v318, %v318
      %v335 = vmul.f32 %v319, %v319
      %v336 = vmul.f32 %v320, %v320
      %v337 = vmul.f32 %v321, %v321
      %v338 = vmul.f32 %v322, %v322
      %v339 = vmul.f32 %v323, %v323
      %v340 = vmul.f32 %v324, %v324
      %v341 = vsel %vm252, %v333, 0.0
      %342 = vadd.xlane.f32.xlu0 %v341
      %v343 = vpop.xlane.xlu0 %342
      %v344 = vsel %vm252, %v334, 0.0
      %345 = vadd.xlane.f32.xlu0 %v344
      %v346 = vpop.xlane.xlu0 %345
      %v347 = vsel %vm252, %v335, 0.0
      %348 = vadd.xlane.f32.xlu0 %v347
      %v349 = vpop.xlane.xlu0 %348
      %v350 = vsel %vm252, %v336, 0.0
      %351 = vadd.xlane.f32.xlu0 %v350
      %v352 = vpop.xlane.xlu0 %351
      %v353 = vsel %vm252, %v337, 0.0
      %354 = vadd.xlane.f32.xlu0 %v353
      %v355 = vpop.xlane.xlu0 %354
      %v356 = vsel %vm252, %v338, 0.0
      %357 = vadd.xlane.f32.xlu0 %v356
      %v358 = vpop.xlane.xlu0 %357
      %v359 = vsel %vm252, %v339, 0.0
      %360 = vadd.xlane.f32.xlu0 %v359
      %v361 = vpop.xlane.xlu0 %360
      %v362 = vsel %vm252, %v340, 0.0
      %363 = vadd.xlane.f32.xlu0 %v362
      %v364 = vpop.xlane.xlu0 %363
      %v365 = vmul.f32 %v325, %v325
      %v366 = vmul.f32 %v326, %v326
      %v367 = vmul.f32 %v327, %v327
      %v368 = vmul.f32 %v328, %v328
      %v369 = vmul.f32 %v329, %v329
      %v370 = vmul.f32 %v330, %v330
      %v371 = vmul.f32 %v331, %v331
      %v372 = vmul.f32 %v332, %v332
      %v373 = vsel %vm252, %v365, 0.0
      %374 = vadd.xlane.f32.xlu0 %v373
      %v375 = vpop.xlane.xlu0 %374
      %v376 = vsel %vm252, %v366, 0.0
      %377 = vadd.xlane.f32.xlu0 %v376
      %v378 = vpop.xlane.xlu0 %377
      %v379 = vsel %vm252, %v367, 0.0
      %380 = vadd.xlane.f32.xlu0 %v379
      %v381 = vpop.xlane.xlu0 %380
      %v382 = vsel %vm252, %v368, 0.0
      %383 = vadd.xlane.f32.xlu0 %v382
      %v384 = vpop.xlane.xlu0 %383
      %v385 = vsel %vm252, %v369, 0.0
      %386 = vadd.xlane.f32.xlu0 %v385
      %v387 = vpop.xlane.xlu0 %386
      %v388 = vsel %vm252, %v370, 0.0
      %389 = vadd.xlane.f32.xlu0 %v388
      %v390 = vpop.xlane.xlu0 %389
      %v391 = vsel %vm252, %v371, 0.0
      %392 = vadd.xlane.f32.xlu0 %v391
      %v393 = vpop.xlane.xlu0 %392
      %v394 = vsel %vm252, %v372, 0.0
      %395 = vadd.xlane.f32.xlu0 %v394
      %v396 = vpop.xlane.xlu0 %395
      %v397 = vadd.f32 %v343, %v375
      %v398 = vadd.f32 %v346, %v378
      %v399 = vadd.f32 %v349, %v381
      %v400 = vadd.f32 %v352, %v384
      %v401 = vadd.f32 %v355, %v387
      %v402 = vadd.f32 %v358, %v390
      %v403 = vadd.f32 %v361, %v393
      %v404 = vadd.f32 %v364, %v396
      %v405 = vmul.f32 %v397, 0.0625
      %v406 = vmul.f32 %v398, 0.0625
      %v407 = vmul.f32 %v399, 0.0625
      %v408 = vmul.f32 %v400, 0.0625
      %v409 = vmul.f32 %v401, 0.0625
      %v410 = vmul.f32 %v402, 0.0625
      %v411 = vmul.f32 %v403, 0.0625
      %v412 = vmul.f32 %v404, 0.0625
      %v413 = vadd.f32 %v405, 1e-05
      %v414 = vadd.f32 %v406, 1e-05
      %v415 = vadd.f32 %v407, 1e-05
      %v416 = vadd.f32 %v408, 1e-05
      %v417 = vadd.f32 %v409, 1e-05
      %v418 = vadd.f32 %v410, 1e-05
      %v419 = vadd.f32 %v411, 1e-05
      %v420 = vadd.f32 %v412, 1e-05
      %v421 = vrsqrt.pop %v413
      %v422 = vmul.f32 %v421, %v413
      %v423 = vmul.f32 %v422, %v421
      %v424 = vmul.f32 0.5, %v423
      %v425 = vsub.f32 1.5, %v424
      %v426 = vmul.f32 %v421, %v425
      %vm427 = vweird.f32 %v413
      %vm428 = vweird.f32 %v421
      %vm429 = vmor %vm427, %vm428
      %v430 = vsel %vm429, %v421, %v426
      %v431 = vrsqrt.pop %v414
      %v432 = vmul.f32 %v431, %v414
      %v433 = vmul.f32 %v432, %v431
      %v434 = vmul.f32 0.5, %v433
      %v435 = vsub.f32 1.5, %v434
      %v436 = vmul.f32 %v431, %v435
      %vm437 = vweird.f32 %v414
      %vm438 = vweird.f32 %v431
      %vm439 = vmor %vm437, %vm438
      %v440 = vsel %vm439, %v431, %v436
      %v441 = vrsqrt.pop %v415
      %v442 = vmul.f32 %v441, %v415
      %v443 = vmul.f32 %v442, %v441
      %v444 = vmul.f32 0.5, %v443
      %v445 = vsub.f32 1.5, %v444
      %v446 = vmul.f32 %v441, %v445
      %vm447 = vweird.f32 %v415
      %vm448 = vweird.f32 %v441
      %vm449 = vmor %vm447, %vm448
      %v450 = vsel %vm449, %v441, %v446
      %v451 = vrsqrt.pop %v416
      %v452 = vmul.f32 %v451, %v416
      %v453 = vmul.f32 %v452, %v451
      %v454 = vmul.f32 0.5, %v453
      %v455 = vsub.f32 1.5, %v454
      %v456 = vmul.f32 %v451, %v455
      %vm457 = vweird.f32 %v416
      %vm458 = vweird.f32 %v451
      %vm459 = vmor %vm457, %vm458
      %v460 = vsel %vm459, %v451, %v456
      %v461 = vrsqrt.pop %v417
      %v462 = vmul.f32 %v461, %v417
      %v463 = vmul.f32 %v462, %v461
      %v464 = vmul.f32 0.5, %v463
      %v465 = vsub.f32 1.5, %v464
      %v466 = vmul.f32 %v461, %v465
      %vm467 = vweird.f32 %v417
      %vm468 = vweird.f32 %v461
      %vm469 = vmor %vm467, %vm468
      %v470 = vsel %vm469, %v461, %v466
      %v471 = vrsqrt.pop %v418
      %v472 = vmul.f32 %v471, %v418
      %v473 = vmul.f32 %v472, %v471
      %v474 = vmul.f32 0.5, %v473
      %v475 = vsub.f32 1.5, %v474
      %v476 = vmul.f32 %v471, %v475
      %vm477 = vweird.f32 %v418
      %vm478 = vweird.f32 %v471
      %vm479 = vmor %vm477, %vm478
      %v480 = vsel %vm479, %v471, %v476
      %v481 = vrsqrt.pop %v419
      %v482 = vmul.f32 %v481, %v419
      %v483 = vmul.f32 %v482, %v481
      %v484 = vmul.f32 0.5, %v483
      %v485 = vsub.f32 1.5, %v484
      %v486 = vmul.f32 %v481, %v485
      %vm487 = vweird.f32 %v419
      %vm488 = vweird.f32 %v481
      %vm489 = vmor %vm487, %vm488
      %v490 = vsel %vm489, %v481, %v486
      %v491 = vrsqrt.pop %v420
      %v492 = vmul.f32 %v491, %v420
      %v493 = vmul.f32 %v492, %v491
      %v494 = vmul.f32 0.5, %v493
      %v495 = vsub.f32 1.5, %v494
      %v496 = vmul.f32 %v491, %v495
      %vm497 = vweird.f32 %v420
      %vm498 = vweird.f32 %v491
      %vm499 = vmor %vm497, %vm498
      %v500 = vsel %vm499, %v491, %v496
      %v501 = vmul.f32 %v317, %v430
      %v502 = vmul.f32 %v318, %v440
      %v503 = vmul.f32 %v319, %v450
      %v504 = vmul.f32 %v320, %v460
      %v505 = vmul.f32 %v321, %v470
      %v506 = vmul.f32 %v322, %v480
      %v507 = vmul.f32 %v323, %v490
      %v508 = vmul.f32 %v324, %v500
      %v509 = vpack.c.bf16 %v502, %v501
      %v510 = vpack.c.bf16 %v504, %v503
      %v511 = vpack.c.bf16 %v506, %v505
      %v512 = vpack.c.bf16 %v508, %v507
      %v513 = vmul.f32 %v325, %v430
      %v514 = vmul.f32 %v326, %v440
      %v515 = vmul.f32 %v327, %v450
      %v516 = vmul.f32 %v328, %v460
      %v517 = vmul.f32 %v329, %v470
      %v518 = vmul.f32 %v330, %v480
      %v519 = vmul.f32 %v331, %v490
      %v520 = vmul.f32 %v332, %v500
      %v521 = vpack.c.bf16 %v514, %v513
      %v522 = vpack.c.bf16 %v516, %v515
      %v523 = vpack.c.bf16 %v518, %v517
      %v524 = vpack.c.bf16 %v520, %v519
      %v525 = vld [vmem:[%s1] sm:$0xf]
      %s526 = scalar_lea.vmem %s1, 4
      %v527 = vld [vmem:[%s526] sm:$0xf]
      %v529 = vsel %vm252, %v521, 0
      %v532 = vsel %vm252, %v522, 0
      %v535 = vsel %vm252, %v523, 0
      %v538 = vsel %vm252, %v524, 0
      %vm540 = vcmask 1043456
      %v542 = vsel %vm540, %v527, 0
      %544 = vmatpush.bf16.msra.mxu0 0
      %545 = vmatpush.bf16.msra.mxu0 0
      %546 = vmatpush.bf16.msra.mxu0 0
      %547 = vmatpush.bf16.msra.mxu0 0
      %548 = vmatpush.bf16.msra.mxu0 0
      %549 = vmatpush.bf16.msra.mxu0 0
      %550 = vmatpush.bf16.msra.mxu0 0
      %551 = vmatpush.bf16.msra.mxu0 %v542
      %552 = vmatmul.bf16.gmra.mxu0 %v529
      %v553 = vpop.f32.mrf.mxu0
      %v554 = vadd.f32 0.0, %v553
      %v555 = vpop.f32.mrf.mxu0
      %v556 = vadd.f32 0.0, %v555
      %557 = vmatmul.bf16.gmra.mxu0 %v532
      %v558 = vpop.f32.mrf.mxu0
      %v559 = vadd.f32 0.0, %v558
      %v560 = vpop.f32.mrf.mxu0
      %v561 = vadd.f32 0.0, %v560
      %562 = vmatmul.bf16.gmra.mxu0 %v535
      %v563 = vpop.f32.mrf.mxu0
      %v564 = vadd.f32 0.0, %v563
      %v565 = vpop.f32.mrf.mxu0
      %v566 = vadd.f32 0.0, %v565
      %567 = vmatmul.bf16.gmra.mxu0 %v538
      %v568 = vpop.f32.mrf.mxu0
      %v569 = vadd.f32 0.0, %v568
      %v570 = vpop.f32.mrf.mxu0
      %v571 = vadd.f32 0.0, %v570
      %572 = vdwg.mxu0
      %v574 = vsel %vm252, %v509, 0
      %v577 = vsel %vm252, %v510, 0
      %v580 = vsel %vm252, %v511, 0
      %v583 = vsel %vm252, %v512, 0
      %v586 = vsel %vm540, %v525, 0
      %588 = vmatpush.bf16.msra.mxu0 0
      %589 = vmatpush.bf16.msra.mxu0 0
      %590 = vmatpush.bf16.msra.mxu0 0
      %591 = vmatpush.bf16.msra.mxu0 0
      %592 = vmatpush.bf16.msra.mxu0 0
      %593 = vmatpush.bf16.msra.mxu0 0
      %594 = vmatpush.bf16.msra.mxu0 0
      %595 = vmatpush.bf16.msra.mxu0 %v586
      %596 = vmatmul.bf16.gmra.mxu0 %v574
      %v597 = vpop.f32.mrf.mxu0
      %v598 = vadd.f32 %v554, %v597
      %v599 = vpop.f32.mrf.mxu0
      %v600 = vadd.f32 %v556, %v599
      %601 = vmatmul.bf16.gmra.mxu0 %v577
      %v602 = vpop.f32.mrf.mxu0
      %v603 = vadd.f32 %v559, %v602
      %v604 = vpop.f32.mrf.mxu0
      %v605 = vadd.f32 %v561, %v604
      %606 = vmatmul.bf16.gmra.mxu0 %v580
      %v607 = vpop.f32.mrf.mxu0
      %v608 = vadd.f32 %v564, %v607
      %v609 = vpop.f32.mrf.mxu0
      %v610 = vadd.f32 %v566, %v609
      %611 = vmatmul.bf16.gmra.mxu0 %v583
      %v612 = vpop.f32.mrf.mxu0
      %v613 = vadd.f32 %v569, %v612
      %v614 = vpop.f32.mrf.mxu0
      %v615 = vadd.f32 %v571, %v614
      %616 = vdwg.mxu0
      %v617 = vld [vmem:[%s2] sm:$0x1]
      %v619 = vperm.slane %v617, 0
      %v621 = vadd.f32 %v598, %v619
      %v622 = vadd.f32 %v600, %v619
      %v623 = vadd.f32 %v603, %v619
      %v624 = vadd.f32 %v605, %v619
      %v625 = vadd.f32 %v608, %v619
      %v626 = vadd.f32 %v610, %v619
      %v627 = vadd.f32 %v613, %v619
      %v628 = vadd.f32 %v615, %v619
      %v629 = vpack.c.bf16 %v621, %v621
      %v630 = vpack.c.bf16 %v622, %v622
      %v631 = vpack.c.bf16 %v623, %v623
      %v632 = vpack.c.bf16 %v624, %v624
      %v633 = vpack.c.bf16 %v625, %v625
      %v634 = vpack.c.bf16 %v626, %v626
      %v635 = vpack.c.bf16 %v627, %v627
      %v636 = vpack.c.bf16 %v628, %v628
      %637 = vst [vmem:[%s211] sm:$0xf] %v629
      %638 = vst [vmem:[%s211 + $0x4] sm:$0xf] %v630
      %639 = vst [vmem:[%s211 + $0x8] sm:$0xf] %v631
      %640 = vst [vmem:[%s211 + $0xc] sm:$0xf] %v632
      %641 = vst [vmem:[%s211 + $0x10] sm:$0xf] %v633
      %642 = vst [vmem:[%s211 + $0x14] sm:$0xf] %v634
      %643 = vst [vmem:[%s211 + $0x18] sm:$0xf] %v635
      %644 = vst [vmem:[%s211 + $0x1c] sm:$0xf] %v636
      %s645 = smul.u32 8, %s19
      %p646 = scmp.lt.s32.totalorder %s18, 1
      %s647 = scalar_select %p646, %s18, 1
      %p648 = scmp.lt.s32.totalorder %s645, 7
      %s649 = scalar_select %p648, %s645, 7
      %s650 = smul.addr %s647, 8
      %s651 = sadd.s32 %s649, %s650
      %s652 = smul.addr %s651, 4
      %s653 = scalar_lea.vmem %s3, %s652
      // Predicated region
      $region33: #{super_mamba_forward.3} parent=31 // pred_check
        %p654 = pneg %p116
      $region34: #{super_mamba_forward.3} parent=31 // pred_check_branch
        %656 = sbr.rel (%p654) target = $region36
      $region35: #{super_mamba_forward.3} parent=31 // pred_region
        %s657 = smul.u32 8, %s19
      $region36: #{super_mamba_forward.3} parent=31 // pred_fallthru
        _
    $region32: #{super_mamba_forward.3} parent=5 // pred_fallthru
      _
    %p658 = scmp.le.s32.totalorder 2, %s9
    // Predicated region
    $region37: #{super_mamba_forward.3} parent=5 // pred_check
      %p659 = pneg %p658
    $region38: #{super_mamba_forward.3} parent=5 // pred_check_branch
      %661 = sbr.rel (%p659) target = $region40
    $region39: #{super_mamba_forward.3} parent=5 // pred_region
      %s662 = ssub.s32 %s9, 2
      // Predicated region
      $region41: #{super_mamba_forward.3} parent=39 // pred_check
        %p663 = pneg %p122
      $region42: #{super_mamba_forward.3} parent=39 // pred_check_branch
        %665 = sbr.rel (%p663) target = $region44
      $region43: #{super_mamba_forward.3} parent=39 // pred_region
        %s666 = smul.u32 8, %s21
        %p667 = scmp.lt.s32.totalorder %s20, 1
        %s668 = scalar_select %p667, %s20, 1
        %p669 = scmp.lt.s32.totalorder %s666, 7
        %s670 = scalar_select %p669, %s666, 7
        %s671 = smul.addr %s668, 8
        %s672 = sadd.s32 %s670, %s671
        %s673 = smul.addr %s672, 4
        %s674 = scalar_lea.vmem %s3, %s673
      $region44: #{super_mamba_forward.3} parent=39 // pred_fallthru
        _
    $region40: #{super_mamba_forward.3} parent=5 // pred_fallthru
      _
  $region6: #{super_mamba_forward.3} parent=0 // loop_footer
    %s13 = sadd.s32 1, %s9
  $region7: #{super_mamba_forward.3} parent=0 // loop_footer_branch
    %8 = sbr.rel target = $region3
  $region8: #{super_mamba_forward.3} parent=0 // loop_exit
    _

// kernel: super_mamba_forward.5
$region0: #{super_mamba_forward.5}
  #allocation0 [shape = 'u32[]', space=smem, size = 0x4, offset = 0x4, fixed_abs, tag = 'smem constant byte address 0x4 - core index']
  #allocation1 [shape = 'u32[72,128]{1,0:T(1,128)}', space=vmem, size = 0x9000, scoped, tag = 'internal scratch']
  #allocation2 [shape = 'f32[2,128]{1,0:T(2,128)}', space=vmem, size = 0x400, scoped, tag = 'scratch operand']
  %s0 = inlined_call_operand.vmem [shape: bf16[2,16,128], index: 0, kind: input, shape index: {}]
  %s1 = inlined_call_operand.vmem [shape: bf16[128,128], index: 1, kind: input, shape index: {}]
  %s2 = inlined_call_operand.vmem [shape: f32[1,128], index: 2, kind: input, shape index: {}]
  %s3 = inlined_call_operand.hbm [shape: f32[2,128], index: 3, kind: output, shape index: {}]
  %s4 = sld [smem:[#allocation0]]
  $region30: #{super_mamba_forward.5} parent=0
    _
  %s6 = ssub.s32 1, %s4
  %s7 = scalar_select 0, %s6, %s4
  $region1: #{super_mamba_forward.5} parent=0
    #allocation3 [shape = 'u8[1024]{0}', space=vmem, size = 0x400, scoped, tag = 'output window, operand 0, single buffered']
    #allocation4 [shape = 's32[1]{0}', space=sflag, size = 0x4, scoped, tag = 'scoped memory for super_mamba_forward.5']
    %8 = vsyncpa [#allocation4], 0
    // Predicated region
    $region2: #{super_mamba_forward.5} parent=1 // pred_check
      _
    $region3: #{super_mamba_forward.5} parent=1 // pred_check_branch
      %10 = sbr.rel (0) target = $region5
    $region4: #{super_mamba_forward.5} parent=1 // pred_region
      _
    $region5: #{super_mamba_forward.5} parent=1 // pred_fallthru
      _
    // Predicated region
    $region6: #{super_mamba_forward.5} parent=1 // pred_check
      _
    $region7: #{super_mamba_forward.5} parent=1 // pred_check_branch
      %12 = sbr.rel (0) target = $region9
    $region8: #{super_mamba_forward.5} parent=1 // pred_region
      _
    $region9: #{super_mamba_forward.5} parent=1 // pred_fallthru
      _
    // Predicated region
    $region10: #{super_mamba_forward.5} parent=1 // pred_check
      _
    $region11: #{super_mamba_forward.5} parent=1 // pred_check_branch
      %14 = sbr.rel (0) target = $region13
    $region12: #{super_mamba_forward.5} parent=1 // pred_region
      _
    $region13: #{super_mamba_forward.5} parent=1 // pred_fallthru
      _
    %p15 = scmp.eq.s32.totalorder 0, 0
    // Predicated region
    $region14: #{super_mamba_forward.5} parent=1 // pred_check
      %p16 = pneg %p15
    $region15: #{super_mamba_forward.5} parent=1 // pred_check_branch
      %18 = sbr.rel (%p16) target = $region17
    $region16: #{super_mamba_forward.5} parent=1 // pred_region
      %19 = vst [vmem:[#allocation2] sm:$0x3] 0.0
    $region17: #{super_mamba_forward.5} parent=1 // pred_fallthru
      _
    %v20 = vld [vmem:[%s0] sm:$0xf]
    %v21 = vld [vmem:[%s0 + $0x4] sm:$0xf]
    %v22 = vld [vmem:[%s0 + $0x8] sm:$0xf]
    %v23 = vld [vmem:[%s0 + $0xc] sm:$0xf]
    %v24 = vunpack.c.l.bf16 %v20
    %v25 = vunpack.c.l.bf16 %v21
    %v26 = vunpack.c.l.bf16 %v22
    %v27 = vunpack.c.l.bf16 %v23
    %28 = vadd.xlane.f32.xlu0 %v24
    %v29 = vpop.xlane.xlu0 %28
    %30 = vadd.xlane.f32.xlu0 %v25
    %v31 = vpop.xlane.xlu0 %30
    %32 = vadd.xlane.f32.xlu0 %v26
    %v33 = vpop.xlane.xlu0 %32
    %34 = vadd.xlane.f32.xlu0 %v27
    %v35 = vpop.xlane.xlu0 %34
    %v36 = vmul.f32 %v29, 0.0625
    %v37 = vmul.f32 %v31, 0.0625
    %v38 = vmul.f32 %v33, 0.0625
    %v39 = vmul.f32 %v35, 0.0625
    %v40 = vsub.f32 %v24, %v36
    %v41 = vsub.f32 %v25, %v37
    %v42 = vsub.f32 %v26, %v38
    %v43 = vsub.f32 %v27, %v39
    %v44 = vlaneseq
    %v45 = vand.u32 %v44, 127
    %vm46 = vcmp.lt.s32.totalorder %v45, 16
    %v47 = vsel %vm46, 1, 0
    %vm48 = vcmp.eq.s32.totalorder %v47, 1
    %v49 = vsel %vm48, %v40, 0.0
    %v50 = vsel %vm48, %v41, 0.0
    %v51 = vsel %vm48, %v42, 0.0
    %v52 = vsel %vm48, %v43, 0.0
    %v53 = vmul.f32 %v49, %v49
    %v54 = vmul.f32 %v50, %v50
    %v55 = vmul.f32 %v51, %v51
    %v56 = vmul.f32 %v52, %v52
    %57 = vadd.xlane.f32.xlu0 %v53
    %v58 = vpop.xlane.xlu0 %57
    %59 = vadd.xlane.f32.xlu0 %v54
    %v60 = vpop.xlane.xlu0 %59
    %61 = vadd.xlane.f32.xlu0 %v55
    %v62 = vpop.xlane.xlu0 %61
    %63 = vadd.xlane.f32.xlu0 %v56
    %v64 = vpop.xlane.xlu0 %63
    %v65 = vmul.f32 %v58, 0.0625
    %v66 = vmul.f32 %v60, 0.0625
    %v67 = vmul.f32 %v62, 0.0625
    %v68 = vmul.f32 %v64, 0.0625
    %v69 = vadd.f32 %v65, 1e-05
    %v70 = vadd.f32 %v66, 1e-05
    %v71 = vadd.f32 %v67, 1e-05
    %v72 = vadd.f32 %v68, 1e-05
    %v73 = vrsqrt.pop %v69
    %v74 = vmul.f32 %v73, %v69
    %v75 = vmul.f32 %v74, %v73
    %v76 = vmul.f32 0.5, %v75
    %v77 = vsub.f32 1.5, %v76
    %v78 = vmul.f32 %v73, %v77
    %vm79 = vweird.f32 %v69
    %vm80 = vweird.f32 %v73
    %vm81 = vmor %vm79, %vm80
    %v82 = vsel %vm81, %v73, %v78
    %v83 = vrsqrt.pop %v70
    %v84 = vmul.f32 %v83, %v70
    %v85 = vmul.f32 %v84, %v83
    %v86 = vmul.f32 0.5, %v85
    %v87 = vsub.f32 1.5, %v86
    %v88 = vmul.f32 %v83, %v87
    %vm89 = vweird.f32 %v70
    %vm90 = vweird.f32 %v83
    %vm91 = vmor %vm89, %vm90
    %v92 = vsel %vm91, %v83, %v88
    %v93 = vrsqrt.pop %v71
    %v94 = vmul.f32 %v93, %v71
    %v95 = vmul.f32 %v94, %v93
    %v96 = vmul.f32 0.5, %v95
    %v97 = vsub.f32 1.5, %v96
    %v98 = vmul.f32 %v93, %v97
    %vm99 = vweird.f32 %v71
    %vm100 = vweird.f32 %v93
    %vm101 = vmor %vm99, %vm100
    %v102 = vsel %vm101, %v93, %v98
    %v103 = vrsqrt.pop %v72
    %v104 = vmul.f32 %v103, %v72
    %v105 = vmul.f32 %v104, %v103
    %v106 = vmul.f32 0.5, %v105
    %v107 = vsub.f32 1.5, %v106
    %v108 = vmul.f32 %v103, %v107
    %vm109 = vweird.f32 %v72
    %vm110 = vweird.f32 %v103
    %vm111 = vmor %vm109, %vm110
    %v112 = vsel %vm111, %v103, %v108
    %v113 = vmul.f32 %v49, %v82
    %v114 = vmul.f32 %v50, %v92
    %v115 = vmul.f32 %v51, %v102
    %v116 = vmul.f32 %v52, %v112
    %v117 = vld [vmem:[#allocation2] sm:$0x3]
    %v118 = vadd.f32 %v113, %v114
    %v119 = vrot.slane %v118, 4
    %v120 = vadd.f32 %v118, %v119
    %v121 = vrot.slane %v120, 2
    %v122 = vadd.f32 %v120, %v121
    %v123 = vrot.slane %v122, 1
    %v124 = vadd.f32 %v122, %v123
    %v125 = vadd.f32 %v115, %v116
    %v126 = vrot.slane %v125, 4
    %v127 = vadd.f32 %v125, %v126
    %v128 = vrot.slane %v127, 2
    %v129 = vadd.f32 %v127, %v128
    %v130 = vrot.slane %v129, 1
    %v131 = vadd.f32 %v129, %v130
    %vm134 = vcmask 1041409
    %v135 = vsel %vm134, %v131, %v124
    %v137 = vadd.f32 %v117, %v135
    %138 = vst [vmem:[#allocation2] sm:$0x3] %v137
    // Predicated region
    $region18: #{super_mamba_forward.5} parent=1 // pred_check
      %p139 = pneg %p15
    $region19: #{super_mamba_forward.5} parent=1 // pred_check_branch
      %141 = sbr.rel (%p139) target = $region21
    $region20: #{super_mamba_forward.5} parent=1 // pred_region
      %v142 = vld [vmem:[#allocation2] sm:$0x3]
      %v143 = vmul.f32 %v142, 0.0625
      %v144 = vpack.c.bf16 %v143, %v143
      %v145 = vld [vmem:[%s1] sm:$0xf]
      %v146 = vld [vmem:[%s1 + $0x4] sm:$0xf]
      %v147 = vld [vmem:[%s1 + $0x8] sm:$0xf]
      %v148 = vld [vmem:[%s1 + $0xc] sm:$0xf]
      %v149 = vld [vmem:[%s1 + $0x10] sm:$0xf]
      %v150 = vld [vmem:[%s1 + $0x14] sm:$0xf]
      %v151 = vld [vmem:[%s1 + $0x18] sm:$0xf]
      %v152 = vld [vmem:[%s1 + $0x1c] sm:$0xf]
      %v153 = vld [vmem:[%s1 + $0x20] sm:$0xf]
      %v154 = vld [vmem:[%s1 + $0x24] sm:$0xf]
      %v155 = vld [vmem:[%s1 + $0x28] sm:$0xf]
      %v156 = vld [vmem:[%s1 + $0x2c] sm:$0xf]
      %v157 = vld [vmem:[%s1 + $0x30] sm:$0xf]
      %v158 = vld [vmem:[%s1 + $0x34] sm:$0xf]
      %v159 = vld [vmem:[%s1 + $0x38] sm:$0xf]
      %v160 = vld [vmem:[%s1 + $0x3c] sm:$0xf]
      %v161 = vld [vmem:[%s2] sm:$0x1]
      %v163 = vperm.slane %v161, 0
      %v181 = vunpack.c.l.b16 %v145
      %v182 = vunpack.c.l.b16 %v146
      %v183 = vunpack.c.l.b16 %v147
      %v184 = vunpack.c.l.b16 %v148
      %v185 = vunpack.c.l.b16 %v149
      %v186 = vunpack.c.l.b16 %v150
      %v187 = vunpack.c.l.b16 %v151
      %v188 = vunpack.c.l.b16 %v152
      %v189 = vunpack.c.l.b16 %v153
      %v190 = vunpack.c.l.b16 %v154
      %v191 = vunpack.c.l.b16 %v155
      %v192 = vunpack.c.l.b16 %v156
      %v193 = vunpack.c.l.b16 %v157
      %v194 = vunpack.c.l.b16 %v158
      %v195 = vunpack.c.l.b16 %v159
      %v196 = vunpack.c.l.b16 %v160
      %v197 = vpack.c.b16 %v182, %v181
      %v198 = vpack.c.b16 %v184, %v183
      %v199 = vpack.c.b16 %v186, %v185
      %v200 = vpack.c.b16 %v188, %v187
      %v201 = vpack.c.b16 %v190, %v189
      %v202 = vpack.c.b16 %v192, %v191
      %v203 = vpack.c.b16 %v194, %v193
      %v204 = vpack.c.b16 %v196, %v195
      %213 = vmatpush.bf16.msra.mxu0 %v204
      %214 = vmatpush.bf16.msra.mxu0 %v203
      %215 = vmatpush.bf16.msra.mxu0 %v202
      %216 = vmatpush.bf16.msra.mxu0 %v201
      %217 = vmatpush.bf16.msra.mxu0 %v200
      %218 = vmatpush.bf16.msra.mxu0 %v199
      %219 = vmatpush.bf16.msra.mxu0 %v198
      %220 = vmatpush.bf16.msra.mxu0 %v197
      %221 = vmatmul.bf16.gmra.mxu0 %v144
      %v222 = vpop.f32.mrf.mxu0
      %v223 = vadd.f32 %v163, %v222
      %v224 = vpop.f32.mrf.mxu0
      %225 = vdwg.mxu0
      %226 = vst [vmem:[#allocation3] sm:$0x3] %v223
    $region21: #{super_mamba_forward.5} parent=1 // pred_fallthru
      _
    // Predicated region
    $region22: #{super_mamba_forward.5} parent=1 // pred_check
      _
    $region23: #{super_mamba_forward.5} parent=1 // pred_check_branch
      %228 = sbr.rel (0) target = $region25
    $region24: #{super_mamba_forward.5} parent=1 // pred_region
      %230 = vsyncadd [#allocation4], 0
      %s232 = sshll.u32 [#allocation3], 4
      %s233 = int_to_ptr.vmem [resolvable:$true] %s232
      %s234 = sshll.u32 %s3, 4
      %s235 = int_to_ptr.hbm [resolvable:$true] %s234
      %237 = dma.vmem_to_hbm [thread:$0]  %s233, 32, %s235, [#allocation4]
    $region25: #{super_mamba_forward.5} parent=1 // pred_fallthru
      _
    // Predicated region
    $region26: #{super_mamba_forward.5} parent=1 // pred_check
      _
    $region27: #{super_mamba_forward.5} parent=1 // pred_check_branch
      %239 = sbr.rel (0) target = $region29
    $region28: #{super_mamba_forward.5} parent=1 // pred_region
      %241 = dma.done [#allocation4], 32
    $region29: #{super_mamba_forward.5} parent=1 // pred_fallthru
      _
    %242 = vsyncpa [#allocation4], 1

// kernel: super_mamba_forward.4
$region0: #{super_mamba_forward.4}
  #allocation0 [shape = 'u32[]', space=smem, size = 0x4, offset = 0x4, fixed_abs, tag = 'smem constant byte address 0x4 - core index']
  #allocation1 [shape = 'u32[72,128]{1,0:T(1,128)}', space=vmem, size = 0x9000, scoped, tag = 'internal scratch']
  %s0 = inlined_call_operand.vmem [shape: bf16[2,4,2,4,256], index: 0, kind: input, shape index: {}]
  %s1 = inlined_call_operand.vmem [shape: bf16[2,256,128], index: 1, kind: input, shape index: {}]
  %s2 = inlined_call_operand.vmem [shape: f32[1,128], index: 2, kind: input, shape index: {}]
  %s3 = inlined_call_operand.vmem [shape: bf16[2,4,4,128], index: 3, kind: output, shape index: {}]
  %s4 = sld [smem:[#allocation0]]
  $region45: #{super_mamba_forward.4} parent=0
    _
  %s6 = ssub.s32 1, %s4
  %s7 = scalar_select 0, %s6, %s4
  loop: start=0, step=1, limit=4
  $region2: #{super_mamba_forward.4} parent=0 // loop_pre_header
    _
  $region3: #{super_mamba_forward.4} parent=0 // loop_header
    %s9 = sphi 0, %s13
    %p10 = scmp.ge.s32.totalorder %s9, 4
    %s16 = sphi 0, %s28
    %s17 = sphi 0, %s24
    %s18 = sphi 0, %s16
    %s19 = sphi 0, %s17
    %s20 = sphi 0, %s18
    %s21 = sphi 0, %s19
    %s33 = sphi 0, %s35
    %s36 = sphi 0, %s33
    %s37 = sphi 0, %s36
    %s53 = sphi 0, %s37
    %s57 = sphi 0, %s57
    %s59 = sphi 0, %s57
    %s60 = sphi 0, %s59
    %s74 = sphi 0, %s60
    %s78 = sphi 0, %s78
    %s80 = sphi 0, %s78
    %s81 = sphi 0, %s80
    %s95 = sphi 0, %s81
    %s103 = sphi 0, %s105
    %s106 = sphi 0, %s103
    %s107 = sphi 0, %s106
    %s123 = sphi 0, %s107
  $region4: #{super_mamba_forward.4} parent=0 // loop_header_branch
    %12 = sbr.rel (%p10) target = $region8
  $region5: #{super_mamba_forward.4} parent=0 // loop_body
    %s14 = ssub.s32 %s9, 1
    %s15 = ssub.s32 %s9, 2
    %s22 = sadd.s32 1, %s17
    %p23 = scmp.ge.s32.totalorder %s22, 1
    %s24 = scalar_select %p23, 0, %s22
    %s25 = sadd.s32 1, %s16
    %s26 = scalar_select %p23, %s25, %s16
    %p27 = scmp.ge.s32.totalorder %s26, 2
    %s28 = scalar_select %p27, 0, %s26
    %s29 = ssub.s32 %s16, %s28
    %s30 = ssub.s32 %s17, %s24
    %s31 = sor.u32 %s29, %s30
    %p32 = scmp.eq.s32.totalorder %s31, 0
    %s34 = sadd.s32 %s33, 1
    %s35 = scalar_select %p32, %s33, %s34
    %p38 = pneg %p32
    %p39 = scmp.eq.s32.totalorder %s9, 1
    %p40 = por %p38, %p39
    %p41 = scmp.ne.s32.totalorder %s33, %s36
    %p42 = scmp.eq.s32.totalorder %s9, 0
    %p43 = por %p41, %p42
    %p44 = scmp.ne.s32.totalorder %s33, %s36
    %p45 = scmp.eq.s32.totalorder %s14, 1
    %p46 = por %p44, %p45
    %p47 = scmp.ne.s32.totalorder %s36, %s37
    %p48 = scmp.eq.s32.totalorder %s14, 0
    %p49 = por %p47, %p48
    %p50 = scmp.ne.s32.totalorder %s36, %s37
    %p51 = scmp.eq.s32.totalorder %s15, 1
    %p52 = por %p50, %p51
    %p54 = scmp.ne.s32.totalorder %s37, %s53
    %p55 = scmp.eq.s32.totalorder %s15, 0
    %p56 = por %p54, %p55
    %s58 = sadd.s32 %s57, 1
    %p61 = scmp.eq.s32.totalorder %s9, 1
    %p62 = scmp.ne.s32.totalorder %s57, %s59
    %p63 = scmp.eq.s32.totalorder %s9, 0
    %p64 = por %p62, %p63
    %p65 = scmp.ne.s32.totalorder %s57, %s59
    %p66 = scmp.eq.s32.totalorder %s14, 1
    %p67 = por %p65, %p66
    %p68 = scmp.ne.s32.totalorder %s59, %s60
    %p69 = scmp.eq.s32.totalorder %s14, 0
    %p70 = por %p68, %p69
    %p71 = scmp.ne.s32.totalorder %s59, %s60
    %p72 = scmp.eq.s32.totalorder %s15, 1
    %p73 = por %p71, %p72
    %p75 = scmp.ne.s32.totalorder %s60, %s74
    %p76 = scmp.eq.s32.totalorder %s15, 0
    %p77 = por %p75, %p76
    %s79 = sadd.s32 %s78, 1
    %p82 = scmp.eq.s32.totalorder %s9, 1
    %p83 = scmp.ne.s32.totalorder %s78, %s80
    %p84 = scmp.eq.s32.totalorder %s9, 0
    %p85 = por %p83, %p84
    %p86 = scmp.ne.s32.totalorder %s78, %s80
    %p87 = scmp.eq.s32.totalorder %s14, 1
    %p88 = por %p86, %p87
    %p89 = scmp.ne.s32.totalorder %s80, %s81
    %p90 = scmp.eq.s32.totalorder %s14, 0
    %p91 = por %p89, %p90
    %p92 = scmp.ne.s32.totalorder %s80, %s81
    %p93 = scmp.eq.s32.totalorder %s15, 1
    %p94 = por %p92, %p93
    %p96 = scmp.ne.s32.totalorder %s81, %s95
    %p97 = scmp.eq.s32.totalorder %s15, 0
    %p98 = por %p96, %p97
    %s99 = ssub.s32 %s16, %s28
    %s100 = ssub.s32 %s17, %s24
    %s101 = sor.u32 %s99, %s100
    %p102 = scmp.eq.s32.totalorder %s101, 0
    %s104 = sadd.s32 %s103, 1
    %s105 = scalar_select %p102, %s103, %s104
    %p108 = pneg %p102
    %p109 = scmp.eq.s32.totalorder %s9, 1
    %p110 = por %p108, %p109
    %p111 = scmp.ne.s32.totalorder %s103, %s106
    %p112 = scmp.eq.s32.totalorder %s9, 0
    %p113 = por %p111, %p112
    %p114 = scmp.ne.s32.totalorder %s103, %s106
    %p115 = scmp.eq.s32.totalorder %s14, 1
    %p116 = por %p114, %p115
    %p117 = scmp.ne.s32.totalorder %s106, %s107
    %p118 = scmp.eq.s32.totalorder %s14, 0
    %p119 = por %p117, %p118
    %p120 = scmp.ne.s32.totalorder %s106, %s107
    %p121 = scmp.eq.s32.totalorder %s15, 1
    %p122 = por %p120, %p121
    %p124 = scmp.ne.s32.totalorder %s107, %s123
    %p125 = scmp.eq.s32.totalorder %s15, 0
    %p126 = por %p124, %p125
    %p127 = scmp.le.s32.totalorder 1, %s9
    %p128 = scmp.lt.s32.totalorder %s9, 3
    %p129 = pnand %p127, %p128
    %p130 = pneg %p129
    // Predicated region
    $region9: #{super_mamba_forward.4} parent=5 // pred_check
      _
    $region10: #{super_mamba_forward.4} parent=5 // pred_check_branch
      %132 = sbr.rel (%p129) target = $region12
    $region11: #{super_mamba_forward.4} parent=5 // pred_region
      %s133 = ssub.s32 %s9, 1
      // Predicated region
      $region13: #{super_mamba_forward.4} parent=11 // pred_check
        %p134 = pneg %p70
      $region14: #{super_mamba_forward.4} parent=11 // pred_check_branch
        %136 = sbr.rel (%p134) target = $region16
      $region15: #{super_mamba_forward.4} parent=11 // pred_region
        _
      $region16: #{super_mamba_forward.4} parent=11 // pred_fallthru
        _
      // Predicated region
      $region17: #{super_mamba_forward.4} parent=11 // pred_check
        %p137 = pneg %p91
      $region18: #{super_mamba_forward.4} parent=11 // pred_check_branch
        %139 = sbr.rel (%p137) target = $region20
      $region19: #{super_mamba_forward.4} parent=11 // pred_region
        _
      $region20: #{super_mamba_forward.4} parent=11 // pred_fallthru
        _
    $region12: #{super_mamba_forward.4} parent=5 // pred_fallthru
      _
    %p140 = scmp.lt.s32.totalorder %s9, 2
    // Predicated region
    $region21: #{super_mamba_forward.4} parent=5 // pred_check
      %p141 = pneg %p140
    $region22: #{super_mamba_forward.4} parent=5 // pred_check_branch
      %143 = sbr.rel (%p141) target = $region24
    $region23: #{super_mamba_forward.4} parent=5 // pred_region
      // Predicated region
      $region25: #{super_mamba_forward.4} parent=23 // pred_check
        %p144 = pneg %p43
      $region26: #{super_mamba_forward.4} parent=23 // pred_check_branch
        %146 = sbr.rel (%p144) target = $region28
      $region27: #{super_mamba_forward.4} parent=23 // pred_region
        %s147 = smul.u32 4, %s17
        %p148 = scmp.lt.s32.totalorder %s16, 1
        %s149 = scalar_select %p148, %s16, 1
        %p150 = scmp.lt.s32.totalorder %s147, 3
        %s151 = scalar_select %p150, %s147, 3
        %s152 = smul.addr %s151, 4
        %s153 = smul.addr %s149, 16
        %s154 = sadd.s32 %s152, %s153
        %s155 = smul.addr %s154, 2
        %s156 = scalar_lea.vmem %s0, %s155
        %s157 = smul.u32 4, %s17
      $region28: #{super_mamba_forward.4} parent=23 // pred_fallthru
        _
    $region24: #{super_mamba_forward.4} parent=5 // pred_fallthru
      _
    %p158 = scmp.le.s32.totalorder 1, %s9
    %p159 = scmp.lt.s32.totalorder %s9, 3
    %p160 = pnand %p158, %p159
    %p161 = pneg %p160
    // Predicated region
    $region29: #{super_mamba_forward.4} parent=5 // pred_check
      _
    $region30: #{super_mamba_forward.4} parent=5 // pred_check_branch
      %163 = sbr.rel (%p160) target = $region32
    $region31: #{super_mamba_forward.4} parent=5 // pred_region
      %s164 = ssub.s32 %s9, 1
      %s165 = smul.u32 4, %s19
      %p166 = scmp.lt.s32.totalorder %s18, 1
      %s167 = scalar_select %p166, %s18, 1
      %p168 = scmp.lt.s32.totalorder %s165, 3
      %s169 = scalar_select %p168, %s165, 3
      %s170 = smul.addr %s169, 4
      %s171 = smul.addr %s167, 16
      %s172 = sadd.s32 %s170, %s171
      %s173 = smul.addr %s172, 2
      %s174 = scalar_lea.vmem %s0, %s173
      %p175 = pneg %p49
      %p176 = pneg %p46
      %p177 = pneg %p70
      %p178 = pneg %p67
      %p179 = pneg %p91
      %p180 = pneg %p88
      %p181 = pneg %p119
      %p182 = pneg %p116
      %s183 = smul.u32 4, %s19
      %p184 = scmp.lt.s32.totalorder %s18, 1
      %s185 = scalar_select %p184, %s18, 1
      %p186 = scmp.lt.s32.totalorder %s183, 3
      %s187 = scalar_select %p186, %s183, 3
      %s188 = smul.addr %s185, 4
      %s189 = sadd.s32 %s187, %s188
      %s190 = smul.addr %s189, 2
      %s191 = scalar_lea.vmem %s3, %s190
      %s192 = smul.u32 4, %s19
      %p193 = scmp.lt.s32.totalorder %s18, 1
      %s194 = scalar_select %p193, %s18, 1
      %p195 = scmp.lt.s32.totalorder %s192, 3
      %s196 = scalar_select %p195, %s192, 3
      %s197 = smul.addr %s196, 4
      %s198 = smul.addr %s194, 16
      %s199 = sadd.s32 %s197, %s198
      %s200 = smul.addr %s199, 2
      %s201 = scalar_lea.vmem %s0, %s200
      %s202 = smul.u32 4, %s19
      %s203 = smul.u32 4, %s19
      %p204 = scmp.lt.s32.totalorder %s18, 1
      %s205 = scalar_select %p204, %s18, 1
      %p206 = scmp.lt.s32.totalorder %s203, 3
      %s207 = scalar_select %p206, %s203, 3
      %s208 = smul.addr %s205, 4
      %s209 = sadd.s32 %s207, %s208
      %s210 = smul.addr %s209, 2
      %s211 = scalar_lea.vmem %s3, %s210
      %s212 = smul.u32 4, %s19
      %v213 = vld [vmem:[%s201] sm:$0xf]
      %v214 = vld [vmem:[%s201 + $0x8] sm:$0xf]
      %v215 = vld [vmem:[%s201 + $0x10] sm:$0xf]
      %v216 = vld [vmem:[%s201 + $0x18] sm:$0xf]
      %v217 = vunpack.c.l.bf16 %v213
      %v218 = vunpack.c.l.bf16 %v214
      %v219 = vunpack.c.l.bf16 %v215
      %v220 = vunpack.c.l.bf16 %v216
      %s221 = scalar_lea.vmem %s201, 4
      %v222 = vld [vmem:[%s221] sm:$0xf]
      %v223 = vld [vmem:[%s221 + $0x8] sm:$0xf]
      %v224 = vld [vmem:[%s221 + $0x10] sm:$0xf]
      %v225 = vld [vmem:[%s221 + $0x18] sm:$0xf]
      %v226 = vunpack.c.l.bf16 %v222
      %v227 = vunpack.c.l.bf16 %v223
      %v228 = vunpack.c.l.bf16 %v224
      %v229 = vunpack.c.l.bf16 %v225
      %234 = vst [vmem:[#allocation1] ss:$2 sm:$0xff] %v217
      %s235 = scalar_lea.vmem [#allocation1], 1
      %236 = vst [vmem:[%s235] ss:$2 sm:$0xff] %v218
      %s237 = scalar_lea.vmem [#allocation1], 16
      %238 = vst [vmem:[%s237] ss:$2 sm:$0xff] %v219
      %s239 = scalar_lea.vmem [#allocation1], 17
      %240 = vst [vmem:[%s239] ss:$2 sm:$0xff] %v220
      %v241 = vld.sshfl [vmem:[#allocation1] sm:$0xff pattern:$0x75316420]
      %v242 = vld.sshfl [vmem:[#allocation1 + $0x8] sm:$0xff pattern:$0x75316420]
      %v243 = vld.sshfl [vmem:[#allocation1 + $0x10] sm:$0xff pattern:$0x75316420]
      %v244 = vld.sshfl [vmem:[#allocation1 + $0x18] sm:$0xff pattern:$0x75316420]
      %v249 = vadd.f32 %v241, %v242
      %250 = vadd.xlane.f32.xlu0 %v249
      %v251 = vpop.xlane.xlu0 %250
      %v252 = vadd.f32 %v243, %v244
      %253 = vadd.xlane.f32.xlu0 %v252
      %v254 = vpop.xlane.xlu0 %253
      %259 = vst [vmem:[#allocation1] ss:$2 sm:$0xff] %v226
      %s260 = scalar_lea.vmem [#allocation1], 1
      %261 = vst [vmem:[%s260] ss:$2 sm:$0xff] %v227
      %s262 = scalar_lea.vmem [#allocation1], 16
      %263 = vst [vmem:[%s262] ss:$2 sm:$0xff] %v228
      %s264 = scalar_lea.vmem [#allocation1], 17
      %265 = vst [vmem:[%s264] ss:$2 sm:$0xff] %v229
      %v266 = vld.sshfl [vmem:[#allocation1] sm:$0xff pattern:$0x75316420]
      %v267 = vld.sshfl [vmem:[#allocation1 + $0x8] sm:$0xff pattern:$0x75316420]
      %v268 = vld.sshfl [vmem:[#allocation1 + $0x10] sm:$0xff pattern:$0x75316420]
      %v269 = vld.sshfl [vmem:[#allocation1 + $0x18] sm:$0xff pattern:$0x75316420]
      %v274 = vadd.f32 %v266, %v267
      %275 = vadd.xlane.f32.xlu0 %v274
      %v276 = vpop.xlane.xlu0 %275
      %v277 = vadd.f32 %v268, %v269
      %278 = vadd.xlane.f32.xlu0 %v277
      %v279 = vpop.xlane.xlu0 %278
      %v280 = vadd.f32 %v251, %v276
      %v281 = vadd.f32 %v254, %v279
      %v282 = vmul.f32 %v280, 0.03125
      %v283 = vmul.f32 %v281, 0.03125
      %v287 = vunpack.c.l.s4 839922192
      %v288 = vunpack.c.0.s8 %v287
      %v289 = vperm.slane %v282, %v288
      %v291 = vunpack.c.l.s4 1985246804
      %v292 = vunpack.c.0.s8 %v291
      %v293 = vperm.slane %v282, %v292
      %v295 = vunpack.c.l.s4 839922192
      %v296 = vunpack.c.0.s8 %v295
      %v297 = vperm.slane %v283, %v296
      %v299 = vunpack.c.l.s4 1985246804
      %v300 = vunpack.c.0.s8 %v299
      %v301 = vperm.slane %v283, %v300
      %v306 = vsub.f32 %v217, %v289
      %v307 = vsub.f32 %v218, %v293
      %v308 = vsub.f32 %v219, %v297
      %v309 = vsub.f32 %v220, %v301
      %v310 = vsub.f32 %v226, %v289
      %v311 = vsub.f32 %v227, %v293
      %v312 = vsub.f32 %v228, %v297
      %v313 = vsub.f32 %v229, %v301
      %v314 = vlaneseq
      %v315 = vand.u32 %v314, 127
      %v316 = vadd.s32 %v315, 128
      %vm317 = vcmp.lt.s32.totalorder %v315, 0
      %v318 = vsub.s32 0, %v315
      %v319 = vsel %vm317, %v318, %v315
      %v320 = vshrl.u32 %v319, 7
      %v321 = vand.u32 %v319, 127
      %v322 = vsub.s32 0, %v321
      %v323 = vsel %vm317, %v322, %v321
      %vm324 = vcmp.lt.s32.totalorder %v316, 0
      %v325 = vsub.s32 0, %v316
      %v326 = vsel %vm324, %v325, %v316
      %v327 = vshrl.u32 %v326, 7
      %v328 = vand.u32 %v326, 127
      %v329 = vsub.s32 0, %v328
      %v330 = vsel %vm324, %v329, %v328
      %vm331 = vcmp.ne.s32.totalorder %v323, 0
      %vm332 = vcmp.ne.s32.totalorder %v330, 0
      %vm333 = vcmp.lt.s32.totalorder %v323, 0
      %vm334 = vcmp.lt.s32.totalorder %v330, 0
      %vm335 = vmand %vm333, %vm331
      %vm336 = vmand %vm334, %vm332
      %v337 = vadd.s32 %v323, 128
      %v338 = vadd.s32 %v330, 128
      %v339 = vsel %vm335, %v337, %v323
      %v340 = vsel %vm336, %v338, %v330
      %vm341 = vcmp.lt.s32.totalorder %v339, 8
      %vm342 = vcmp.lt.s32.totalorder %v340, 8
      %v343 = vsel %vm341, 1, 0
      %v344 = vsel %vm342, 1, 0
      %vm345 = vcmp.eq.s32.totalorder %v343, 1
      %vm346 = vcmp.eq.s32.totalorder %v344, 1
      %351 = vst [vmem:[#allocation1] ss:$2 sm:$0xff] %v306
      %s352 = scalar_lea.vmem [#allocation1], 1
      %353 = vst [vmem:[%s352] ss:$2 sm:$0xff] %v307
      %s354 = scalar_lea.vmem [#allocation1], 16
      %355 = vst [vmem:[%s354] ss:$2 sm:$0xff] %v308
      %s356 = scalar_lea.vmem [#allocation1], 17
      %357 = vst [vmem:[%s356] ss:$2 sm:$0xff] %v309
      %v358 = vld.sshfl [vmem:[#allocation1] sm:$0xff pattern:$0x75316420]
      %v359 = vld.sshfl [vmem:[#allocation1 + $0x8] sm:$0xff pattern:$0x75316420]
      %v360 = vld.sshfl [vmem:[#allocation1 + $0x10] sm:$0xff pattern:$0x75316420]
      %v361 = vld.sshfl [vmem:[#allocation1 + $0x18] sm:$0xff pattern:$0x75316420]
      %v366 = vsel %vm345, %v358, 0.0
      %v367 = vsel %vm346, %v359, 0.0
      %v368 = vsel %vm345, %v360, 0.0
      %v369 = vsel %vm346, %v361, 0.0
      %374 = vst [vmem:[#allocation1] ss:$2 sm:$0xff] %v310
      %s375 = scalar_lea.vmem [#allocation1], 1
      %376 = vst [vmem:[%s375] ss:$2 sm:$0xff] %v311
      %s377 = scalar_lea.vmem [#allocation1], 16
      %378 = vst [vmem:[%s377] ss:$2 sm:$0xff] %v312
      %s379 = scalar_lea.vmem [#allocation1], 17
      %380 = vst [vmem:[%s379] ss:$2 sm:$0xff] %v313
      %v381 = vld.sshfl [vmem:[#allocation1] sm:$0xff pattern:$0x75316420]
      %v382 = vld.sshfl [vmem:[#allocation1 + $0x8] sm:$0xff pattern:$0x75316420]
      %v383 = vld.sshfl [vmem:[#allocation1 + $0x10] sm:$0xff pattern:$0x75316420]
      %v384 = vld.sshfl [vmem:[#allocation1 + $0x18] sm:$0xff pattern:$0x75316420]
      %v389 = vsel %vm345, %v381, 0.0
      %v390 = vsel %vm346, %v382, 0.0
      %v391 = vsel %vm345, %v383, 0.0
      %v392 = vsel %vm346, %v384, 0.0
      %v393 = vmul.f32 %v366, %v366
      %v394 = vmul.f32 %v367, %v367
      %v395 = vmul.f32 %v368, %v368
      %v396 = vmul.f32 %v369, %v369
      %v397 = vadd.f32 %v393, %v394
      %398 = vadd.xlane.f32.xlu0 %v397
      %v399 = vpop.xlane.xlu0 %398
      %v400 = vadd.f32 %v395, %v396
      %401 = vadd.xlane.f32.xlu0 %v400
      %v402 = vpop.xlane.xlu0 %401
      %v403 = vmul.f32 %v389, %v389
      %v404 = vmul.f32 %v390, %v390
      %v405 = vmul.f32 %v391, %v391
      %v406 = vmul.f32 %v392, %v392
      %v407 = vadd.f32 %v403, %v404
      %408 = vadd.xlane.f32.xlu0 %v407
      %v409 = vpop.xlane.xlu0 %408
      %v410 = vadd.f32 %v405, %v406
      %411 = vadd.xlane.f32.xlu0 %v410
      %v412 = vpop.xlane.xlu0 %411
      %v413 = vadd.f32 %v399, %v409
      %v414 = vadd.f32 %v402, %v412
      %v415 = vmul.f32 %v413, 0.03125
      %v416 = vmul.f32 %v414, 0.03125
      %v417 = vadd.f32 %v415, 1e-05
      %v418 = vadd.f32 %v416, 1e-05
      %v419 = vrsqrt.pop %v417
      %v420 = vmul.f32 %v419, %v417
      %v421 = vmul.f32 %v420, %v419
      %v422 = vmul.f32 0.5, %v421
      %v423 = vsub.f32 1.5, %v422
      %v424 = vmul.f32 %v419, %v423
      %vm425 = vweird.f32 %v417
      %vm426 = vweird.f32 %v419
      %vm427 = vmor %vm425, %vm426
      %v428 = vsel %vm427, %v419, %v424
      %v429 = vrsqrt.pop %v418
      %v430 = vmul.f32 %v429, %v418
      %v431 = vmul.f32 %v430, %v429
      %v432 = vmul.f32 0.5, %v431
      %v433 = vsub.f32 1.5, %v432
      %v434 = vmul.f32 %v429, %v433
      %vm435 = vweird.f32 %v418
      %vm436 = vweird.f32 %v429
      %vm437 = vmor %vm435, %vm436
      %v438 = vsel %vm437, %v429, %v434
      %v439 = vmul.f32 %v366, %v428
      %v440 = vmul.f32 %v367, %v428
      %v441 = vmul.f32 %v368, %v438
      %v442 = vmul.f32 %v369, %v438
      %v443 = vpack.c.bf16 %v441, %v439
      %v444 = vpack.c.bf16 %v442, %v440
      %v445 = vmul.f32 %v389, %v428
      %v446 = vmul.f32 %v390, %v428
      %v447 = vmul.f32 %v391, %v438
      %v448 = vmul.f32 %v392, %v438
      %v449 = vpack.c.bf16 %v447, %v445
      %v450 = vpack.c.bf16 %v448, %v446
      %v451 = vld [vmem:[%s1] sm:$0xf]
      %v452 = vld [vmem:[%s1 + $0x4] sm:$0xf]
      %v453 = vld [vmem:[%s1 + $0x8] sm:$0xf]
      %v454 = vld [vmem:[%s1 + $0xc] sm:$0xf]
      %v455 = vld [vmem:[%s1 + $0x10] sm:$0xf]
      %v456 = vld [vmem:[%s1 + $0x14] sm:$0xf]
      %v457 = vld [vmem:[%s1 + $0x18] sm:$0xf]
      %v458 = vld [vmem:[%s1 + $0x1c] sm:$0xf]
      %v459 = vld [vmem:[%s1 + $0x20] sm:$0xf]
      %v460 = vld [vmem:[%s1 + $0x24] sm:$0xf]
      %v461 = vld [vmem:[%s1 + $0x28] sm:$0xf]
      %v462 = vld [vmem:[%s1 + $0x2c] sm:$0xf]
      %v463 = vld [vmem:[%s1 + $0x30] sm:$0xf]
      %v464 = vld [vmem:[%s1 + $0x34] sm:$0xf]
      %v465 = vld [vmem:[%s1 + $0x38] sm:$0xf]
      %v466 = vld [vmem:[%s1 + $0x3c] sm:$0xf]
      %v467 = vld [vmem:[%s1 + $0x40] sm:$0xf]
      %v468 = vld [vmem:[%s1 + $0x44] sm:$0xf]
      %v469 = vld [vmem:[%s1 + $0x48] sm:$0xf]
      %v470 = vld [vmem:[%s1 + $0x4c] sm:$0xf]
      %v471 = vld [vmem:[%s1 + $0x50] sm:$0xf]
      %v472 = vld [vmem:[%s1 + $0x54] sm:$0xf]
      %v473 = vld [vmem:[%s1 + $0x58] sm:$0xf]
      %v474 = vld [vmem:[%s1 + $0x5c] sm:$0xf]
      %v475 = vld [vmem:[%s1 + $0x60] sm:$0xf]
      %v476 = vld [vmem:[%s1 + $0x64] sm:$0xf]
      %v477 = vld [vmem:[%s1 + $0x68] sm:$0xf]
      %v478 = vld [vmem:[%s1 + $0x6c] sm:$0xf]
      %v479 = vld [vmem:[%s1 + $0x70] sm:$0xf]
      %v480 = vld [vmem:[%s1 + $0x74] sm:$0xf]
      %v481 = vld [vmem:[%s1 + $0x78] sm:$0xf]
      %v482 = vld [vmem:[%s1 + $0x7c] sm:$0xf]
      %s483 = scalar_lea.vmem %s1, 128
      %v484 = vld [vmem:[%s483] sm:$0xf]
      %v485 = vld [vmem:[%s483 + $0x4] sm:$0xf]
      %v486 = vld [vmem:[%s483 + $0x8] sm:$0xf]
      %v487 = vld [vmem:[%s483 + $0xc] sm:$0xf]
      %v488 = vld [vmem:[%s483 + $0x10] sm:$0xf]
      %v489 = vld [vmem:[%s483 + $0x14] sm:$0xf]
      %v490 = vld [vmem:[%s483 + $0x18] sm:$0xf]
      %v491 = vld [vmem:[%s483 + $0x1c] sm:$0xf]
      %v492 = vld [vmem:[%s483 + $0x20] sm:$0xf]
      %v493 = vld [vmem:[%s483 + $0x24] sm:$0xf]
      %v494 = vld [vmem:[%s483 + $0x28] sm:$0xf]
      %v495 = vld [vmem:[%s483 + $0x2c] sm:$0xf]
      %v496 = vld [vmem:[%s483 + $0x30] sm:$0xf]
      %v497 = vld [vmem:[%s483 + $0x34] sm:$0xf]
      %v498 = vld [vmem:[%s483 + $0x38] sm:$0xf]
      %v499 = vld [vmem:[%s483 + $0x3c] sm:$0xf]
      %v500 = vld [vmem:[%s483 + $0x40] sm:$0xf]
      %v501 = vld [vmem:[%s483 + $0x44] sm:$0xf]
      %v502 = vld [vmem:[%s483 + $0x48] sm:$0xf]
      %v503 = vld [vmem:[%s483 + $0x4c] sm:$0xf]
      %v504 = vld [vmem:[%s483 + $0x50] sm:$0xf]
      %v505 = vld [vmem:[%s483 + $0x54] sm:$0xf]
      %v506 = vld [vmem:[%s483 + $0x58] sm:$0xf]
      %v507 = vld [vmem:[%s483 + $0x5c] sm:$0xf]
      %v508 = vld [vmem:[%s483 + $0x60] sm:$0xf]
      %v509 = vld [vmem:[%s483 + $0x64] sm:$0xf]
      %v510 = vld [vmem:[%s483 + $0x68] sm:$0xf]
      %v511 = vld [vmem:[%s483 + $0x6c] sm:$0xf]
      %v512 = vld [vmem:[%s483 + $0x70] sm:$0xf]
      %v513 = vld [vmem:[%s483 + $0x74] sm:$0xf]
      %v514 = vld [vmem:[%s483 + $0x78] sm:$0xf]
      %v515 = vld [vmem:[%s483 + $0x7c] sm:$0xf]
      %v548 = vunpack.c.l.b16 %v484
      %v549 = vunpack.c.l.b16 %v485
      %v550 = vunpack.c.l.b16 %v486
      %v551 = vunpack.c.l.b16 %v487
      %v552 = vunpack.c.l.b16 %v488
      %v553 = vunpack.c.l.b16 %v489
      %v554 = vunpack.c.l.b16 %v490
      %v555 = vunpack.c.l.b16 %v491
      %v556 = vunpack.c.l.b16 %v492
      %v557 = vunpack.c.l.b16 %v493
      %v558 = vunpack.c.l.b16 %v494
      %v559 = vunpack.c.l.b16 %v495
      %v560 = vunpack.c.l.b16 %v496
      %v561 = vunpack.c.l.b16 %v497
      %v562 = vunpack.c.l.b16 %v498
      %v563 = vunpack.c.l.b16 %v499
      %v564 = vunpack.c.l.b16 %v500
      %v565 = vunpack.c.l.b16 %v501
      %v566 = vunpack.c.l.b16 %v502
      %v567 = vunpack.c.l.b16 %v503
      %v568 = vunpack.c.l.b16 %v504
      %v569 = vunpack.c.l.b16 %v505
      %v570 = vunpack.c.l.b16 %v506
      %v571 = vunpack.c.l.b16 %v507
      %v572 = vunpack.c.l.b16 %v508
      %v573 = vunpack.c.l.b16 %v509
      %v574 = vunpack.c.l.b16 %v510
      %v575 = vunpack.c.l.b16 %v511
      %v576 = vunpack.c.l.b16 %v512
      %v577 = vunpack.c.l.b16 %v513
      %v578 = vunpack.c.l.b16 %v514
      %v579 = vunpack.c.l.b16 %v515
      %v580 = vpack.c.b16 %v549, %v548
      %v581 = vpack.c.b16 %v551, %v550
      %v582 = vpack.c.b16 %v553, %v552
      %v583 = vpack.c.b16 %v555, %v554
      %v584 = vpack.c.b16 %v557, %v556
      %v585 = vpack.c.b16 %v559, %v558
      %v586 = vpack.c.b16 %v561, %v560
      %v587 = vpack.c.b16 %v563, %v562
      %v588 = vpack.c.b16 %v565, %v564
      %v589 = vpack.c.b16 %v567, %v566
      %v590 = vpack.c.b16 %v569, %v568
      %v591 = vpack.c.b16 %v571, %v570
      %v592 = vpack.c.b16 %v573, %v572
      %v593 = vpack.c.b16 %v575, %v574
      %v594 = vpack.c.b16 %v577, %v576
      %v595 = vpack.c.b16 %v579, %v578
      %612 = vmatpush.bf16.msra.mxu0 %v587
      %613 = vmatpush.bf16.msra.mxu0 %v586
      %614 = vmatpush.bf16.msra.mxu0 %v585
      %615 = vmatpush.bf16.msra.mxu0 %v584
      %616 = vmatpush.bf16.msra.mxu0 %v583
      %617 = vmatpush.bf16.msra.mxu0 %v582
      %618 = vmatpush.bf16.msra.mxu0 %v581
      %619 = vmatpush.bf16.msra.mxu0 %v580
      %620 = vmatmul.bf16.gmra.mxu0 %v449
      %v621 = vpop.f32.mrf.mxu0
      %v622 = vadd.f32 0.0, %v621
      %v623 = vpop.f32.mrf.mxu0
      %v624 = vadd.f32 0.0, %v623
      %625 = vdwg.mxu0
      %626 = vmatpush.bf16.msra.mxu0 %v595
      %627 = vmatpush.bf16.msra.mxu0 %v594
      %628 = vmatpush.bf16.msra.mxu0 %v593
      %629 = vmatpush.bf16.msra.mxu0 %v592
      %630 = vmatpush.bf16.msra.mxu0 %v591
      %631 = vmatpush.bf16.msra.mxu0 %v590
      %632 = vmatpush.bf16.msra.mxu0 %v589
      %633 = vmatpush.bf16.msra.mxu0 %v588
      %634 = vmatmul.bf16.gmra.mxu0 %v450
      %v635 = vpop.f32.mrf.mxu0
      %v636 = vadd.f32 %v622, %v635
      %v637 = vpop.f32.mrf.mxu0
      %v638 = vadd.f32 %v624, %v637
      %639 = vdwg.mxu0
      %v672 = vunpack.c.l.b16 %v451
      %v673 = vunpack.c.l.b16 %v452
      %v674 = vunpack.c.l.b16 %v453
      %v675 = vunpack.c.l.b16 %v454
      %v676 = vunpack.c.l.b16 %v455
      %v677 = vunpack.c.l.b16 %v456
      %v678 = vunpack.c.l.b16 %v457
      %v679 = vunpack.c.l.b16 %v458
      %v680 = vunpack.c.l.b16 %v459
      %v681 = vunpack.c.l.b16 %v460
      %v682 = vunpack.c.l.b16 %v461
      %v683 = vunpack.c.l.b16 %v462
      %v684 = vunpack.c.l.b16 %v463
      %v685 = vunpack.c.l.b16 %v464
      %v686 = vunpack.c.l.b16 %v465
      %v687 = vunpack.c.l.b16 %v466
      %v688 = vunpack.c.l.b16 %v467
      %v689 = vunpack.c.l.b16 %v468
      %v690 = vunpack.c.l.b16 %v469
      %v691 = vunpack.c.l.b16 %v470
      %v692 = vunpack.c.l.b16 %v471
      %v693 = vunpack.c.l.b16 %v472
      %v694 = vunpack.c.l.b16 %v473
      %v695 = vunpack.c.l.b16 %v474
      %v696 = vunpack.c.l.b16 %v475
      %v697 = vunpack.c.l.b16 %v476
      %v698 = vunpack.c.l.b16 %v477
      %v699 = vunpack.c.l.b16 %v478
      %v700 = vunpack.c.l.b16 %v479
      %v701 = vunpack.c.l.b16 %v480
      %v702 = vunpack.c.l.b16 %v481
      %v703 = vunpack.c.l.b16 %v482
      %v704 = vpack.c.b16 %v673, %v672
      %v705 = vpack.c.b16 %v675, %v674
      %v706 = vpack.c.b16 %v677, %v676
      %v707 = vpack.c.b16 %v679, %v678
      %v708 = vpack.c.b16 %v681, %v680
      %v709 = vpack.c.b16 %v683, %v682
      %v710 = vpack.c.b16 %v685, %v684
      %v711 = vpack.c.b16 %v687, %v686
      %v712 = vpack.c.b16 %v689, %v688
      %v713 = vpack.c.b16 %v691, %v690
      %v714 = vpack.c.b16 %v693, %v692
      %v715 = vpack.c.b16 %v695, %v694
      %v716 = vpack.c.b16 %v697, %v696
      %v717 = vpack.c.b16 %v699, %v698
      %v718 = vpack.c.b16 %v701, %v700
      %v719 = vpack.c.b16 %v703, %v702
      %736 = vmatpush.bf16.msra.mxu0 %v711
      %737 = vmatpush.bf16.msra.mxu0 %v710
      %738 = vmatpush.bf16.msra.mxu0 %v709
      %739 = vmatpush.bf16.msra.mxu0 %v708
      %740 = vmatpush.bf16.msra.mxu0 %v707
      %741 = vmatpush.bf16.msra.mxu0 %v706
      %742 = vmatpush.bf16.msra.mxu0 %v705
      %743 = vmatpush.bf16.msra.mxu0 %v704
      %744 = vmatmul.bf16.gmra.mxu0 %v443
      %v745 = vpop.f32.mrf.mxu0
      %v746 = vadd.f32 %v636, %v745
      %v747 = vpop.f32.mrf.mxu0
      %v748 = vadd.f32 %v638, %v747
      %749 = vdwg.mxu0
      %750 = vmatpush.bf16.msra.mxu0 %v719
      %751 = vmatpush.bf16.msra.mxu0 %v718
      %752 = vmatpush.bf16.msra.mxu0 %v717
      %753 = vmatpush.bf16.msra.mxu0 %v716
      %754 = vmatpush.bf16.msra.mxu0 %v715
      %755 = vmatpush.bf16.msra.mxu0 %v714
      %756 = vmatpush.bf16.msra.mxu0 %v713
      %757 = vmatpush.bf16.msra.mxu0 %v712
      %758 = vmatmul.bf16.gmra.mxu0 %v444
      %v759 = vpop.f32.mrf.mxu0
      %v760 = vadd.f32 %v746, %v759
      %v761 = vpop.f32.mrf.mxu0
      %v762 = vadd.f32 %v748, %v761
      %763 = vdwg.mxu0
      %v764 = vld [vmem:[%s2] sm:$0x1]
      %v766 = vperm.slane %v764, 0
      %v768 = vadd.f32 %v760, %v766
      %v769 = vadd.f32 %v762, %v766
      %v772 = vrot.slane %v768, 4
      %v773 = vrot.slane %v769, 4
      %v776 = vpack.c.bf16 %v768, %v768
      %v777 = vpack.c.bf16 %v772, %v772
      %v778 = vpack.c.bf16 %v769, %v769
      %v779 = vpack.c.bf16 %v773, %v773
      %780 = vst [vmem:[%s211] sm:$0x3] %v776
      %781 = vst [vmem:[%s211 + $0x2] sm:$0x3] %v777
      %782 = vst [vmem:[%s211 + $0x4] sm:$0x3] %v778
      %783 = vst [vmem:[%s211 + $0x6] sm:$0x3] %v779
      %s784 = smul.u32 4, %s19
      %p785 = scmp.lt.s32.totalorder %s18, 1
      %s786 = scalar_select %p785, %s18, 1
      %p787 = scmp.lt.s32.totalorder %s784, 3
      %s788 = scalar_select %p787, %s784, 3
      %s789 = smul.addr %s786, 4
      %s790 = sadd.s32 %s788, %s789
      %s791 = smul.addr %s790, 2
      %s792 = scalar_lea.vmem %s3, %s791
      // Predicated region
      $region33: #{super_mamba_forward.4} parent=31 // pred_check
        %p793 = pneg %p116
      $region34: #{super_mamba_forward.4} parent=31 // pred_check_branch
        %795 = sbr.rel (%p793) target = $region36
      $region35: #{super_mamba_forward.4} parent=31 // pred_region
        %s796 = smul.u32 4, %s19
      $region36: #{super_mamba_forward.4} parent=31 // pred_fallthru
        _
    $region32: #{super_mamba_forward.4} parent=5 // pred_fallthru
      _
    %p797 = scmp.le.s32.totalorder 2, %s9
    // Predicated region
    $region37: #{super_mamba_forward.4} parent=5 // pred_check
      %p798 = pneg %p797
    $region38: #{super_mamba_forward.4} parent=5 // pred_check_branch
      %800 = sbr.rel (%p798) target = $region40
    $region39: #{super_mamba_forward.4} parent=5 // pred_region
      %s801 = ssub.s32 %s9, 2
      // Predicated region
      $region41: #{super_mamba_forward.4} parent=39 // pred_check
        %p802 = pneg %p122
      $region42: #{super_mamba_forward.4} parent=39 // pred_check_branch
        %804 = sbr.rel (%p802) target = $region44
      $region43: #{super_mamba_forward.4} parent=39 // pred_region
        %s805 = smul.u32 4, %s21
        %p806 = scmp.lt.s32.totalorder %s20, 1
        %s807 = scalar_select %p806, %s20, 1
        %p808 = scmp.lt.s32.totalorder %s805, 3
        %s809 = scalar_select %p808, %s805, 3
        %s810 = smul.addr %s807, 4
        %s811 = sadd.s32 %s809, %s810
        %s812 = smul.addr %s811, 2
        %s813 = scalar_lea.vmem %s3, %s812
      $region44: #{super_mamba_forward.4} parent=39 // pred_fallthru
        _
    $region40: #{super_mamba_forward.4} parent=5 // pred_fallthru
      _
  $region6: #{super_mamba_forward.4} parent=0 // loop_footer
    %s13 = sadd.s32 1, %s9
  $region7: #{super_mamba_forward.4} parent=0 // loop_footer_branch
    %8 = sbr.rel target = $region3
  $region8: #{super_mamba_forward.4} parent=0 // loop_exit
    _

</llo_original>
